<compile_context>
chip_gen: v7x
topology: tpu7x:2x2x1
jax: 0.10.0
libtpu: 0.0.40
codegen_flags: <defaults>
</compile_context>

<pallas_src>
import functools
import math

import jax
import jax.numpy as jnp
import numpy as np
from jax import lax
from jax.experimental import pallas as pl
from jax.experimental.pallas import tpu as pltpu


# ----------------------------- in-kernel math ------------------------------ #

def _layer_norm(x, gamma, beta, eps=1e-5):
    # x: (N, E); gamma/beta: (1, E)  -- matches nn.LayerNorm(n_embed)
    mu = jnp.mean(x, axis=-1, keepdims=True)
    xc = x - mu
    var = jnp.mean(xc * xc, axis=-1, keepdims=True)
    return xc * lax.rsqrt(var + eps) * gamma + beta


def _attention(q, k, v, mask_add, wo, bo, num_heads, scale):
    """All heads at once, no per-head loop / lane slicing.

    q: (Nq, E); k, v: (Nk, E); mask_add: (Nq, Nk) additive (0 keep, -1e9 drop).
    Heads are handled by a block-diagonal key/value layout:
      k_big[h*Nk + j, f] = k[j, f] if column f belongs to head h else 0
    so per-head scores land side by side along lanes:
      s[i, h*Nk + j] = <q_h[i], k_h[j]>
    and the attention reduces to three dense 2D MXU matmuls + one softmax.
    """
    nq, e = q.shape
    nk = k.shape[0]
    hd = e // num_heads
    rows = num_heads * nk

    # head selector sel[h*Nk + j, f] = 1.0 iff f // hd == h   (built on VPU)
    r_id = lax.broadcasted_iota(jnp.int32, (rows, e), 0).astype(jnp.float32)
    c_id = lax.broadcasted_iota(jnp.int32, (rows, e), 1).astype(jnp.float32)
    sel = (jnp.floor(r_id / float(nk)) == jnp.floor(c_id / float(hd)))
    sel = sel.astype(jnp.float32)                                  # (H*Nk, E)

    k_big = jnp.concatenate([k] * num_heads, axis=0) * sel         # (H*Nk, E)
    v_big = jnp.concatenate([v] * num_heads, axis=0) * sel         # (H*Nk, E)

    # per-head scores for all heads along lanes: (Nq, H*Nk)
    s = lax.dot_general(q, k_big, (((1,), (1,)), ((), ())),
                        preferred_element_type=jnp.float32) * scale
    s = s + jnp.concatenate([mask_add] * num_heads, axis=1)
    # shared row shift: softmax is shift-invariant per head, scores are O(1)
    s = s - jnp.max(s, axis=-1, keepdims=True)
    p = jnp.exp(s)                       # masked entries underflow to exactly 0

    o = jnp.dot(p, v_big, preferred_element_type=jnp.float32)      # (Nq, E)
    den = jnp.dot(p, sel, preferred_element_type=jnp.float32)      # per-head sums
    o = o * pl.reciprocal(den, approx=True)                        # EUP slot
    return jnp.dot(o, wo, preferred_element_type=jnp.float32) + bo


# ------------------------------- the kernel -------------------------------- #

def decoder_block_kernel(x_ref, val_ref, key_ref, tmask_ref, smask_ref,
                         sa_wqkv_ref, sa_bqkv_ref, sa_wo_ref, sa_bo_ref,
                         ca_w_ref, ca_b_ref, ln_g_ref, ln_b_ref,
                         ff_w1_ref, ff_b1_ref, ff_w2_ref, ff_b2_ref,
                         o_ref, *, num_heads):
    b, t, e = x_ref.shape
    s = key_ref.shape[1]
    hd = e // num_heads
    scale = 1.0 / math.sqrt(hd)

    # fold batch into the sublane (row) dimension: leading-dim-only reshapes
    x = x_ref[...].reshape(b * t, e)
    key = key_ref[...].reshape(b * s, e)
    val = val_ref[...].reshape(b * s, e)
    ln_g = ln_g_ref[...]        # (3, E): decoder-LN, block-LN1, block-LN2
    ln_b = ln_b_ref[...]
    ca_b = ca_b_ref[...]        # (4, E): q, k, v, o biases

    # 1) masked multi-head self-attention (fused QKV projection) + residual
    qkv = jnp.dot(x, sa_wqkv_ref[...],
                  preferred_element_type=jnp.float32) + sa_bqkv_ref[...]
    sa = _attention(qkv[:, :e], qkv[:, e:2 * e], qkv[:, 2 * e:],
                    tmask_ref[...], sa_wo_ref[...], sa_bo_ref[...],
                    num_heads, scale)
    x = _layer_norm(x + sa, ln_g[0:1, :], ln_b[0:1, :])

    # 2) cross attention (query = x, key/value from encoder) + residual + LN
    qp = jnp.dot(x, ca_w_ref[0], preferred_element_type=jnp.float32) + ca_b[0:1, :]
    kp = jnp.dot(key, ca_w_ref[1], preferred_element_type=jnp.float32) + ca_b[1:2, :]
    vp = jnp.dot(val, ca_w_ref[2], preferred_element_type=jnp.float32) + ca_b[2:3, :]
    ca = _attention(qp, kp, vp, smask_ref[...], ca_w_ref[3], ca_b[3:4, :],
                    num_heads, scale)
    h = _layer_norm(ca + x, ln_g[1:2, :], ln_b[1:2, :])

    # 3) FFN (E -> 4E -> E) + residual + LN
    hid = jnp.maximum(
        jnp.dot(h, ff_w1_ref[...], preferred_element_type=jnp.float32)
        + ff_b1_ref[...], 0.0)
    ff = jnp.dot(hid, ff_w2_ref[...], preferred_element_type=jnp.float32) \
        + ff_b2_ref[...]
    out = _layer_norm(ff + h, ln_g[2:3, :], ln_b[2:3, :])

    o_ref[...] = out.reshape(b, t, e)


# --------------------------------- wrapper --------------------------------- #

def _block_diag_additive_mask(mask):
    """(B, Tq, Tk) 1/0 mask -> (B*Tq, B*Tk) additive mask.

    0.0 where attention is allowed (same batch and mask nonzero), -1e9
    elsewhere, so the kernel can run the whole batch as one dense attention.
    """
    b, tq, tk = mask.shape
    add = jnp.where(mask == 0.0, jnp.float32(-1e9), jnp.float32(0.0))  # (B,Tq,Tk)
    same_batch = jnp.eye(b, dtype=jnp.bool_)                           # (B, B)
    big = jnp.where(same_batch[:, None, :, None], add[:, :, None, :],
                    jnp.float32(-1e9))                                 # (B,Tq,B,Tk)
    return big.reshape(b * tq, b * tk)


@functools.partial(jax.jit, static_argnames=("num_heads",))
def decoder_block(x, value, key, trg_mask, src_mask, params, *, num_heads):
    b, t, e = x.shape
    s = key.shape[1]

    # fuse self-attention Q/K/V weights into one (E, 3E) projection
    sa_wqkv = jnp.concatenate(
        [params["sa_w"][0], params["sa_w"][1], params["sa_w"][2]], axis=1)
    sa_bqkv = jnp.concatenate(
        [params["sa_b"][0], params["sa_b"][1], params["sa_b"][2]], axis=0)[None, :]
    sa_wo = params["sa_w"][3]
    sa_bo = params["sa_b"][3][None, :]

    # additive, block-diagonal-over-batch masks (precomputed outside the kernel)
    tmask = _block_diag_additive_mask(trg_mask)   # (B*T, B*T)
    smask = _block_diag_additive_mask(src_mask)   # (B*T, B*S)

    kernel = functools.partial(decoder_block_kernel, num_heads=num_heads)
    vspec = pl.BlockSpec(memory_space=pltpu.MemorySpace.VMEM)

    return pl.pallas_call(
        kernel,
        out_shape=jax.ShapeDtypeStruct((b, t, e), jnp.float32),
        in_specs=[vspec] * 17,
        out_specs=vspec,
    )(x, value, key, tmask, smask,
      sa_wqkv, sa_bqkv, sa_wo, sa_bo,
      params["ca_w"], params["ca_b"], params["ln_g"], params["ln_b"],
      params["ff_w1"], params["ff_b1"], params["ff_w2"], params["ff_b2"])


# ------------------------- pure-JAX reference check ------------------------ #

def _ref_mha(q_in, k_in, v_in, mask, wq, bq, wk, bk, wv, bv, wo, bo, num_heads):
    e = q_in.shape[-1]
    hd = e // num_heads
    q = q_in @ wq + bq
    k = k_in @ wk + bk
    v = v_in @ wv + bv
    heads = []
    for hh in range(num_heads):
        sl = slice(hh * hd, (hh + 1) * hd)
        sc = (q[:, sl] @ k[:, sl].T) / math.sqrt(hd)
        sc = jnp.where(mask == 0.0, -1e9, sc)
        p = jax.nn.softmax(sc, axis=-1)
        heads.append(p @ v[:, sl])
    return jnp.concatenate(heads, axis=-1) @ wo + bo


def decoder_block_ref(x, value, key, trg_mask, src_mask, p, num_heads):
    outs = []
    for bi in range(x.shape[0]):
        xb, vb, kb = x[bi], value[bi], key[bi]
        sa = _ref_mha(xb, xb, xb, trg_mask[bi],
                      p["sa_w"][0], p["sa_b"][0], p["sa_w"][1], p["sa_b"][1],
                      p["sa_w"][2], p["sa_b"][2], p["sa_w"][3], p["sa_b"][3],
                      num_heads)
        h1 = _layer_norm(xb + sa, p["ln_g"][0:1], p["ln_b"][0:1])
        ca = _ref_mha(h1, kb, vb, src_mask[bi],
                      p["ca_w"][0], p["ca_b"][0], p["ca_w"][1], p["ca_b"][1],
                      p["ca_w"][2], p["ca_b"][2], p["ca_w"][3], p["ca_b"][3],
                      num_heads)
        h2 = _layer_norm(ca + h1, p["ln_g"][1:2], p["ln_b"][1:2])
        ff = jnp.maximum(h2 @ p["ff_w1"] + p["ff_b1"], 0.0) @ p["ff_w2"] + p["ff_b2"]
        outs.append(_layer_norm(ff + h2, p["ln_g"][2:3], p["ln_b"][2:3]))
    return jnp.stack(outs, axis=0)


# ----------------------------------- main ----------------------------------- #

if __name__ == "__main__":
    # n_embed=32, num_heads=4, target seq=8, source seq=8, batch=2, dropout=0.0
    B, T, S, E, H = 2, 8, 8, 32, 4

    root = jax.random.PRNGKey(0)
    ks = jax.random.split(root, 12)

    def w(kk, shape, scl=0.02):
        return (scl * jax.random.normal(kk, shape)).astype(jnp.float32)

    params = {
        "sa_w": w(ks[0], (4, E, E)),      # q, k, v, o projections (self-attn)
        "sa_b": w(ks[1], (4, E)),
        "ca_w": w(ks[2], (4, E, E)),      # q, k, v, o projections (cross-attn)
        "ca_b": w(ks[3], (4, E)),
        "ln_g": jnp.ones((3, E), jnp.float32),   # PyTorch LayerNorm default init
        "ln_b": jnp.zeros((3, E), jnp.float32),
        "ff_w1": w(ks[4], (E, 4 * E)),
        "ff_b1": w(ks[5], (1, 4 * E)),
        "ff_w2": w(ks[6], (4 * E, E)),
        "ff_b2": w(ks[7], (1, E)),
    }

    x = jax.random.normal(ks[8], (B, T, E), jnp.float32)
    value = jax.random.normal(ks[9], (B, S, E), jnp.float32)
    key = jax.random.normal(ks[10], (B, S, E), jnp.float32)
    trg_mask = jnp.broadcast_to(jnp.tril(jnp.ones((T, T), jnp.float32)), (B, T, T))
    src_mask = jnp.ones((B, T, S), jnp.float32)

    out = decoder_block(x, value, key, trg_mask, src_mask, params, num_heads=H)
    out = jax.block_until_ready(out)

    ref = decoder_block_ref(x, value, key, trg_mask, src_mask, params, H)
    # tolerance covers the approx EUP reciprocal used for the softmax denominator
    np.testing.assert_allclose(np.asarray(out), np.asarray(ref),
                               rtol=1e-3, atol=1e-3)
    print("KERNEL_OK")
</pallas_src>

<mosaic_0001>
module attributes {stable_mosaic.version = 11 : i64} {
  func.func @decoder_block_kernel(%arg0: memref<2x8x32xf32, #tpu.memory_space<vmem>>, %arg1: memref<2x8x32xf32, #tpu.memory_space<vmem>>, %arg2: memref<2x8x32xf32, #tpu.memory_space<vmem>>, %arg3: memref<16x16xf32, #tpu.memory_space<vmem>>, %arg4: memref<16x16xf32, #tpu.memory_space<vmem>>, %arg5: memref<32x96xf32, #tpu.memory_space<vmem>>, %arg6: memref<1x96xf32, #tpu.memory_space<vmem>>, %arg7: memref<32x32xf32, #tpu.memory_space<vmem>>, %arg8: memref<1x32xf32, #tpu.memory_space<vmem>>, %arg9: memref<4x32x32xf32, #tpu.memory_space<vmem>>, %arg10: memref<4x32xf32, #tpu.memory_space<vmem>>, %arg11: memref<3x32xf32, #tpu.memory_space<vmem>>, %arg12: memref<3x32xf32, #tpu.memory_space<vmem>>, %arg13: memref<32x128xf32, #tpu.memory_space<vmem>>, %arg14: memref<1x128xf32, #tpu.memory_space<vmem>>, %arg15: memref<128x32xf32, #tpu.memory_space<vmem>>, %arg16: memref<1x32xf32, #tpu.memory_space<vmem>>, %arg17: memref<2x8x32xf32, #tpu.memory_space<vmem>>) attributes {dimension_semantics = [], scalar_prefetch = 0 : i64, scratch_operands = 0 : i64, tpu.core_type = #tpu.core_type<tc>} {
    %c0 = arith.constant 0 : index
    %c0_0 = arith.constant 0 : index
    %c0_1 = arith.constant 0 : index
    %0 = vector.load %arg0[%c0, %c0_0, %c0_1] : memref<2x8x32xf32, #tpu.memory_space<vmem>>, vector<2x8x32xf32>
    %1 = vector.shape_cast %0 : vector<2x8x32xf32> to vector<16x32xf32>
    %c0_2 = arith.constant 0 : index
    %c0_3 = arith.constant 0 : index
    %c0_4 = arith.constant 0 : index
    %2 = vector.load %arg2[%c0_2, %c0_3, %c0_4] : memref<2x8x32xf32, #tpu.memory_space<vmem>>, vector<2x8x32xf32>
    %3 = vector.shape_cast %2 : vector<2x8x32xf32> to vector<16x32xf32>
    %c0_5 = arith.constant 0 : index
    %c0_6 = arith.constant 0 : index
    %c0_7 = arith.constant 0 : index
    %4 = vector.load %arg1[%c0_5, %c0_6, %c0_7] : memref<2x8x32xf32, #tpu.memory_space<vmem>>, vector<2x8x32xf32>
    %5 = vector.shape_cast %4 : vector<2x8x32xf32> to vector<16x32xf32>
    %c0_8 = arith.constant 0 : index
    %c0_9 = arith.constant 0 : index
    %6 = vector.load %arg11[%c0_8, %c0_9] : memref<3x32xf32, #tpu.memory_space<vmem>>, vector<3x32xf32>
    %c0_10 = arith.constant 0 : index
    %c0_11 = arith.constant 0 : index
    %7 = vector.load %arg12[%c0_10, %c0_11] : memref<3x32xf32, #tpu.memory_space<vmem>>, vector<3x32xf32>
    %c0_12 = arith.constant 0 : index
    %c0_13 = arith.constant 0 : index
    %8 = vector.load %arg10[%c0_12, %c0_13] : memref<4x32xf32, #tpu.memory_space<vmem>>, vector<4x32xf32>
    %c0_14 = arith.constant 0 : index
    %c0_15 = arith.constant 0 : index
    %9 = vector.load %arg5[%c0_14, %c0_15] : memref<32x96xf32, #tpu.memory_space<vmem>>, vector<32x96xf32>
    %cst = arith.constant dense<0.000000e+00> : vector<16x96xf32>
    %10 = tpu.matmul %1, %9, %cst {dimension_numbers = #tpu.dot_dimension_numbers<[1], [0], [0], [1], [0, 0, 1, 1], [], []>} : vector<16x32xf32>, vector<32x96xf32>, vector<16x96xf32> -> vector<16x96xf32>
    %c0_16 = arith.constant 0 : index
    %c0_17 = arith.constant 0 : index
    %11 = vector.load %arg6[%c0_16, %c0_17] : memref<1x96xf32, #tpu.memory_space<vmem>>, vector<1x96xf32>
    %12 = vector.broadcast %11 : vector<1x96xf32> to vector<16x96xf32>
    %13 = arith.addf %10, %12 : vector<16x96xf32>
    %14 = vector.extract_strided_slice %13 {offsets = [0, 0], sizes = [16, 32], strides = [1, 1]} : vector<16x96xf32> to vector<16x32xf32>
    %15 = vector.extract_strided_slice %13 {offsets = [0, 32], sizes = [16, 32], strides = [1, 1]} : vector<16x96xf32> to vector<16x32xf32>
    %16 = vector.extract_strided_slice %13 {offsets = [0, 64], sizes = [16, 32], strides = [1, 1]} : vector<16x96xf32> to vector<16x32xf32>
    %c0_18 = arith.constant 0 : index
    %c0_19 = arith.constant 0 : index
    %17 = vector.load %arg3[%c0_18, %c0_19] : memref<16x16xf32, #tpu.memory_space<vmem>>, vector<16x16xf32>
    %c0_20 = arith.constant 0 : index
    %c0_21 = arith.constant 0 : index
    %18 = vector.load %arg7[%c0_20, %c0_21] : memref<32x32xf32, #tpu.memory_space<vmem>>, vector<32x32xf32>
    %c0_22 = arith.constant 0 : index
    %c0_23 = arith.constant 0 : index
    %19 = vector.load %arg8[%c0_22, %c0_23] : memref<1x32xf32, #tpu.memory_space<vmem>>, vector<1x32xf32>
    %20 = tpu.iota {dimensions = array<i32: 0>} : vector<64x32xi32>
    %21 = arith.sitofp %20 : vector<64x32xi32> to vector<64x32xf32>
    %22 = tpu.iota {dimensions = array<i32: 1>} : vector<64x32xi32>
    %23 = arith.sitofp %22 : vector<64x32xi32> to vector<64x32xf32>
    %cst_24 = arith.constant 1.600000e+01 : f32
    %24 = vector.broadcast %cst_24 : f32 to vector<64x32xf32>
    %25 = arith.divf %21, %24 : vector<64x32xf32>
    %26 = math.floor %25 : vector<64x32xf32>
    %cst_25 = arith.constant 8.000000e+00 : f32
    %27 = vector.broadcast %cst_25 : f32 to vector<64x32xf32>
    %28 = arith.divf %23, %27 : vector<64x32xf32>
    %29 = math.floor %28 : vector<64x32xf32>
    %30 = arith.cmpf oeq, %26, %29 : vector<64x32xf32>
    %31 = arith.extui %30 : vector<64x32xi1> to vector<64x32xi32>
    %32 = arith.sitofp %31 : vector<64x32xi32> to vector<64x32xf32>
    %33 = tpu.concatenate %15, %15, %15, %15 in 0 : vector<16x32xf32>, vector<16x32xf32>, vector<16x32xf32>, vector<16x32xf32> -> vector<64x32xf32>
    %34 = arith.mulf %33, %32 : vector<64x32xf32>
    %35 = tpu.concatenate %16, %16, %16, %16 in 0 : vector<16x32xf32>, vector<16x32xf32>, vector<16x32xf32>, vector<16x32xf32> -> vector<64x32xf32>
    %36 = arith.mulf %35, %32 : vector<64x32xf32>
    %cst_26 = arith.constant dense<0.000000e+00> : vector<16x64xf32>
    %37 = tpu.matmul %14, %34, %cst_26 {dimension_numbers = #tpu.dot_dimension_numbers<[1], [1], [0], [0], [0, 0, 1, 0], [], []>} : vector<16x32xf32>, vector<64x32xf32>, vector<16x64xf32> -> vector<16x64xf32>
    %cst_27 = arith.constant 0.353553385 : f32
    %38 = vector.broadcast %cst_27 : f32 to vector<16x64xf32>
    %39 = arith.mulf %37, %38 : vector<16x64xf32>
    %40 = tpu.concatenate %17, %17, %17, %17 in 1 : vector<16x16xf32>, vector<16x16xf32>, vector<16x16xf32>, vector<16x16xf32> -> vector<16x64xf32>
    %41 = arith.addf %39, %40 : vector<16x64xf32>
    %cst_28 = arith.constant dense<0xFF800000> : vector<16xf32>
    %42 = vector.multi_reduction <maximumf>, %41, %cst_28 [1] : vector<16x64xf32> to vector<16xf32>
    %43 = vector.shape_cast %42 : vector<16xf32> to vector<16x1xf32>
    %44 = vector.broadcast %43 : vector<16x1xf32> to vector<16x64xf32>
    %45 = arith.subf %41, %44 : vector<16x64xf32>
    %46 = math.exp %45 : vector<16x64xf32>
    %cst_29 = arith.constant dense<0.000000e+00> : vector<16x32xf32>
    %47 = tpu.matmul %46, %36, %cst_29 {dimension_numbers = #tpu.dot_dimension_numbers<[1], [0], [0], [1], [0, 0, 1, 1], [], []>} : vector<16x64xf32>, vector<64x32xf32>, vector<16x32xf32> -> vector<16x32xf32>
    %cst_30 = arith.constant dense<0.000000e+00> : vector<16x32xf32>
    %48 = tpu.matmul %46, %32, %cst_30 {dimension_numbers = #tpu.dot_dimension_numbers<[1], [0], [0], [1], [0, 0, 1, 1], [], []>} : vector<16x64xf32>, vector<64x32xf32>, vector<16x32xf32> -> vector<16x32xf32>
    %49 = tpu.reciprocal %48 {approx = true} : vector<16x32xf32> -> vector<16x32xf32>
    %50 = arith.mulf %47, %49 : vector<16x32xf32>
    %cst_31 = arith.constant dense<0.000000e+00> : vector<16x32xf32>
    %51 = tpu.matmul %50, %18, %cst_31 {dimension_numbers = #tpu.dot_dimension_numbers<[1], [0], [0], [1], [0, 0, 1, 1], [], []>} : vector<16x32xf32>, vector<32x32xf32>, vector<16x32xf32> -> vector<16x32xf32>
    %52 = vector.broadcast %19 : vector<1x32xf32> to vector<16x32xf32>
    %53 = arith.addf %51, %52 : vector<16x32xf32>
    %54 = arith.addf %1, %53 : vector<16x32xf32>
    %55 = vector.extract_strided_slice %6 {offsets = [0, 0], sizes = [1, 32], strides = [1, 1]} : vector<3x32xf32> to vector<1x32xf32>
    %56 = vector.extract_strided_slice %7 {offsets = [0, 0], sizes = [1, 32], strides = [1, 1]} : vector<3x32xf32> to vector<1x32xf32>
    %cst_32 = arith.constant dense<0.000000e+00> : vector<16xf32>
    %57 = vector.multi_reduction <add>, %54, %cst_32 [1] : vector<16x32xf32> to vector<16xf32>
    %58 = vector.shape_cast %57 : vector<16xf32> to vector<16x1xf32>
    %cst_33 = arith.constant 3.200000e+01 : f32
    %59 = vector.broadcast %cst_33 : f32 to vector<16x1xf32>
    %60 = arith.divf %58, %59 : vector<16x1xf32>
    %61 = vector.broadcast %60 : vector<16x1xf32> to vector<16x32xf32>
    %62 = arith.subf %54, %61 : vector<16x32xf32>
    %63 = arith.mulf %62, %62 : vector<16x32xf32>
    %cst_34 = arith.constant dense<0.000000e+00> : vector<16xf32>
    %64 = vector.multi_reduction <add>, %63, %cst_34 [1] : vector<16x32xf32> to vector<16xf32>
    %65 = vector.shape_cast %64 : vector<16xf32> to vector<16x1xf32>
    %cst_35 = arith.constant 3.200000e+01 : f32
    %66 = vector.broadcast %cst_35 : f32 to vector<16x1xf32>
    %67 = arith.divf %65, %66 : vector<16x1xf32>
    %cst_36 = arith.constant 9.99999974E-6 : f32
    %68 = vector.broadcast %cst_36 : f32 to vector<16x1xf32>
    %69 = arith.addf %67, %68 : vector<16x1xf32>
    %70 = math.rsqrt %69 : vector<16x1xf32>
    %71 = vector.broadcast %70 : vector<16x1xf32> to vector<16x32xf32>
    %72 = arith.mulf %62, %71 : vector<16x32xf32>
    %73 = vector.broadcast %55 : vector<1x32xf32> to vector<16x32xf32>
    %74 = arith.mulf %72, %73 : vector<16x32xf32>
    %75 = vector.broadcast %56 : vector<1x32xf32> to vector<16x32xf32>
    %76 = arith.addf %74, %75 : vector<16x32xf32>
    %c0_37 = arith.constant 0 : index
    %c0_38 = arith.constant 0 : index
    %c0_39 = arith.constant 0 : index
    %77 = vector.load %arg9[%c0_37, %c0_38, %c0_39] : memref<4x32x32xf32, #tpu.memory_space<vmem>>, vector<1x32x32xf32>
    %78 = vector.shape_cast %77 : vector<1x32x32xf32> to vector<32x32xf32>
    %cst_40 = arith.constant dense<0.000000e+00> : vector<16x32xf32>
    %79 = tpu.matmul %76, %78, %cst_40 {dimension_numbers = #tpu.dot_dimension_numbers<[1], [0], [0], [1], [0, 0, 1, 1], [], []>} : vector<16x32xf32>, vector<32x32xf32>, vector<16x32xf32> -> vector<16x32xf32>
    %80 = vector.extract_strided_slice %8 {offsets = [0, 0], sizes = [1, 32], strides = [1, 1]} : vector<4x32xf32> to vector<1x32xf32>
    %81 = vector.broadcast %80 : vector<1x32xf32> to vector<16x32xf32>
    %82 = arith.addf %79, %81 : vector<16x32xf32>
    %c1 = arith.constant 1 : index
    %c0_41 = arith.constant 0 : index
    %c0_42 = arith.constant 0 : index
    %83 = vector.load %arg9[%c1, %c0_41, %c0_42] : memref<4x32x32xf32, #tpu.memory_space<vmem>>, vector<1x32x32xf32>
    %84 = vector.shape_cast %83 : vector<1x32x32xf32> to vector<32x32xf32>
    %cst_43 = arith.constant dense<0.000000e+00> : vector<16x32xf32>
    %85 = tpu.matmul %3, %84, %cst_43 {dimension_numbers = #tpu.dot_dimension_numbers<[1], [0], [0], [1], [0, 0, 1, 1], [], []>} : vector<16x32xf32>, vector<32x32xf32>, vector<16x32xf32> -> vector<16x32xf32>
    %86 = vector.extract_strided_slice %8 {offsets = [1, 0], sizes = [1, 32], strides = [1, 1]} : vector<4x32xf32> to vector<1x32xf32>
    %87 = vector.broadcast %86 : vector<1x32xf32> to vector<16x32xf32>
    %88 = arith.addf %85, %87 : vector<16x32xf32>
    %c2 = arith.constant 2 : index
    %c0_44 = arith.constant 0 : index
    %c0_45 = arith.constant 0 : index
    %89 = vector.load %arg9[%c2, %c0_44, %c0_45] : memref<4x32x32xf32, #tpu.memory_space<vmem>>, vector<1x32x32xf32>
    %90 = vector.shape_cast %89 : vector<1x32x32xf32> to vector<32x32xf32>
    %cst_46 = arith.constant dense<0.000000e+00> : vector<16x32xf32>
    %91 = tpu.matmul %5, %90, %cst_46 {dimension_numbers = #tpu.dot_dimension_numbers<[1], [0], [0], [1], [0, 0, 1, 1], [], []>} : vector<16x32xf32>, vector<32x32xf32>, vector<16x32xf32> -> vector<16x32xf32>
    %92 = vector.extract_strided_slice %8 {offsets = [2, 0], sizes = [1, 32], strides = [1, 1]} : vector<4x32xf32> to vector<1x32xf32>
    %93 = vector.broadcast %92 : vector<1x32xf32> to vector<16x32xf32>
    %94 = arith.addf %91, %93 : vector<16x32xf32>
    %c0_47 = arith.constant 0 : index
    %c0_48 = arith.constant 0 : index
    %95 = vector.load %arg4[%c0_47, %c0_48] : memref<16x16xf32, #tpu.memory_space<vmem>>, vector<16x16xf32>
    %c3 = arith.constant 3 : index
    %c0_49 = arith.constant 0 : index
    %c0_50 = arith.constant 0 : index
    %96 = vector.load %arg9[%c3, %c0_49, %c0_50] : memref<4x32x32xf32, #tpu.memory_space<vmem>>, vector<1x32x32xf32>
    %97 = vector.shape_cast %96 : vector<1x32x32xf32> to vector<32x32xf32>
    %98 = vector.extract_strided_slice %8 {offsets = [3, 0], sizes = [1, 32], strides = [1, 1]} : vector<4x32xf32> to vector<1x32xf32>
    %99 = tpu.iota {dimensions = array<i32: 0>} : vector<64x32xi32>
    %100 = arith.sitofp %99 : vector<64x32xi32> to vector<64x32xf32>
    %101 = tpu.iota {dimensions = array<i32: 1>} : vector<64x32xi32>
    %102 = arith.sitofp %101 : vector<64x32xi32> to vector<64x32xf32>
    %cst_51 = arith.constant 1.600000e+01 : f32
    %103 = vector.broadcast %cst_51 : f32 to vector<64x32xf32>
    %104 = arith.divf %100, %103 : vector<64x32xf32>
    %105 = math.floor %104 : vector<64x32xf32>
    %cst_52 = arith.constant 8.000000e+00 : f32
    %106 = vector.broadcast %cst_52 : f32 to vector<64x32xf32>
    %107 = arith.divf %102, %106 : vector<64x32xf32>
    %108 = math.floor %107 : vector<64x32xf32>
    %109 = arith.cmpf oeq, %105, %108 : vector<64x32xf32>
    %110 = arith.extui %109 : vector<64x32xi1> to vector<64x32xi32>
    %111 = arith.sitofp %110 : vector<64x32xi32> to vector<64x32xf32>
    %112 = tpu.concatenate %88, %88, %88, %88 in 0 : vector<16x32xf32>, vector<16x32xf32>, vector<16x32xf32>, vector<16x32xf32> -> vector<64x32xf32>
    %113 = arith.mulf %112, %111 : vector<64x32xf32>
    %114 = tpu.concatenate %94, %94, %94, %94 in 0 : vector<16x32xf32>, vector<16x32xf32>, vector<16x32xf32>, vector<16x32xf32> -> vector<64x32xf32>
    %115 = arith.mulf %114, %111 : vector<64x32xf32>
    %cst_53 = arith.constant dense<0.000000e+00> : vector<16x64xf32>
    %116 = tpu.matmul %82, %113, %cst_53 {dimension_numbers = #tpu.dot_dimension_numbers<[1], [1], [0], [0], [0, 0, 1, 0], [], []>} : vector<16x32xf32>, vector<64x32xf32>, vector<16x64xf32> -> vector<16x64xf32>
    %cst_54 = arith.constant 0.353553385 : f32
    %117 = vector.broadcast %cst_54 : f32 to vector<16x64xf32>
    %118 = arith.mulf %116, %117 : vector<16x64xf32>
    %119 = tpu.concatenate %95, %95, %95, %95 in 1 : vector<16x16xf32>, vector<16x16xf32>, vector<16x16xf32>, vector<16x16xf32> -> vector<16x64xf32>
    %120 = arith.addf %118, %119 : vector<16x64xf32>
    %cst_55 = arith.constant dense<0xFF800000> : vector<16xf32>
    %121 = vector.multi_reduction <maximumf>, %120, %cst_55 [1] : vector<16x64xf32> to vector<16xf32>
    %122 = vector.shape_cast %121 : vector<16xf32> to vector<16x1xf32>
    %123 = vector.broadcast %122 : vector<16x1xf32> to vector<16x64xf32>
    %124 = arith.subf %120, %123 : vector<16x64xf32>
    %125 = math.exp %124 : vector<16x64xf32>
    %cst_56 = arith.constant dense<0.000000e+00> : vector<16x32xf32>
    %126 = tpu.matmul %125, %115, %cst_56 {dimension_numbers = #tpu.dot_dimension_numbers<[1], [0], [0], [1], [0, 0, 1, 1], [], []>} : vector<16x64xf32>, vector<64x32xf32>, vector<16x32xf32> -> vector<16x32xf32>
    %cst_57 = arith.constant dense<0.000000e+00> : vector<16x32xf32>
    %127 = tpu.matmul %125, %111, %cst_57 {dimension_numbers = #tpu.dot_dimension_numbers<[1], [0], [0], [1], [0, 0, 1, 1], [], []>} : vector<16x64xf32>, vector<64x32xf32>, vector<16x32xf32> -> vector<16x32xf32>
    %128 = tpu.reciprocal %127 {approx = true} : vector<16x32xf32> -> vector<16x32xf32>
    %129 = arith.mulf %126, %128 : vector<16x32xf32>
    %cst_58 = arith.constant dense<0.000000e+00> : vector<16x32xf32>
    %130 = tpu.matmul %129, %97, %cst_58 {dimension_numbers = #tpu.dot_dimension_numbers<[1], [0], [0], [1], [0, 0, 1, 1], [], []>} : vector<16x32xf32>, vector<32x32xf32>, vector<16x32xf32> -> vector<16x32xf32>
    %131 = vector.broadcast %98 : vector<1x32xf32> to vector<16x32xf32>
    %132 = arith.addf %130, %131 : vector<16x32xf32>
    %133 = arith.addf %132, %76 : vector<16x32xf32>
    %134 = vector.extract_strided_slice %6 {offsets = [1, 0], sizes = [1, 32], strides = [1, 1]} : vector<3x32xf32> to vector<1x32xf32>
    %135 = vector.extract_strided_slice %7 {offsets = [1, 0], sizes = [1, 32], strides = [1, 1]} : vector<3x32xf32> to vector<1x32xf32>
    %cst_59 = arith.constant dense<0.000000e+00> : vector<16xf32>
    %136 = vector.multi_reduction <add>, %133, %cst_59 [1] : vector<16x32xf32> to vector<16xf32>
    %137 = vector.shape_cast %136 : vector<16xf32> to vector<16x1xf32>
    %cst_60 = arith.constant 3.200000e+01 : f32
    %138 = vector.broadcast %cst_60 : f32 to vector<16x1xf32>
    %139 = arith.divf %137, %138 : vector<16x1xf32>
    %140 = vector.broadcast %139 : vector<16x1xf32> to vector<16x32xf32>
    %141 = arith.subf %133, %140 : vector<16x32xf32>
    %142 = arith.mulf %141, %141 : vector<16x32xf32>
    %cst_61 = arith.constant dense<0.000000e+00> : vector<16xf32>
    %143 = vector.multi_reduction <add>, %142, %cst_61 [1] : vector<16x32xf32> to vector<16xf32>
    %144 = vector.shape_cast %143 : vector<16xf32> to vector<16x1xf32>
    %cst_62 = arith.constant 3.200000e+01 : f32
    %145 = vector.broadcast %cst_62 : f32 to vector<16x1xf32>
    %146 = arith.divf %144, %145 : vector<16x1xf32>
    %cst_63 = arith.constant 9.99999974E-6 : f32
    %147 = vector.broadcast %cst_63 : f32 to vector<16x1xf32>
    %148 = arith.addf %146, %147 : vector<16x1xf32>
    %149 = math.rsqrt %148 : vector<16x1xf32>
    %150 = vector.broadcast %149 : vector<16x1xf32> to vector<16x32xf32>
    %151 = arith.mulf %141, %150 : vector<16x32xf32>
    %152 = vector.broadcast %134 : vector<1x32xf32> to vector<16x32xf32>
    %153 = arith.mulf %151, %152 : vector<16x32xf32>
    %154 = vector.broadcast %135 : vector<1x32xf32> to vector<16x32xf32>
    %155 = arith.addf %153, %154 : vector<16x32xf32>
    %c0_64 = arith.constant 0 : index
    %c0_65 = arith.constant 0 : index
    %156 = vector.load %arg13[%c0_64, %c0_65] : memref<32x128xf32, #tpu.memory_space<vmem>>, vector<32x128xf32>
    %cst_66 = arith.constant dense<0.000000e+00> : vector<16x128xf32>
    %157 = tpu.matmul %155, %156, %cst_66 {dimension_numbers = #tpu.dot_dimension_numbers<[1], [0], [0], [1], [0, 0, 1, 1], [], []>} : vector<16x32xf32>, vector<32x128xf32>, vector<16x128xf32> -> vector<16x128xf32>
    %c0_67 = arith.constant 0 : index
    %c0_68 = arith.constant 0 : index
    %158 = vector.load %arg14[%c0_67, %c0_68] : memref<1x128xf32, #tpu.memory_space<vmem>>, vector<1x128xf32>
    %159 = vector.broadcast %158 : vector<1x128xf32> to vector<16x128xf32>
    %160 = arith.addf %157, %159 : vector<16x128xf32>
    %cst_69 = arith.constant 0.000000e+00 : f32
    %161 = vector.broadcast %cst_69 : f32 to vector<16x128xf32>
    %162 = arith.maximumf %160, %161 : vector<16x128xf32>
    %c0_70 = arith.constant 0 : index
    %c0_71 = arith.constant 0 : index
    %163 = vector.load %arg15[%c0_70, %c0_71] : memref<128x32xf32, #tpu.memory_space<vmem>>, vector<128x32xf32>
    %cst_72 = arith.constant dense<0.000000e+00> : vector<16x32xf32>
    %164 = tpu.matmul %162, %163, %cst_72 {dimension_numbers = #tpu.dot_dimension_numbers<[1], [0], [0], [1], [0, 0, 1, 1], [], []>} : vector<16x128xf32>, vector<128x32xf32>, vector<16x32xf32> -> vector<16x32xf32>
    %c0_73 = arith.constant 0 : index
    %c0_74 = arith.constant 0 : index
    %165 = vector.load %arg16[%c0_73, %c0_74] : memref<1x32xf32, #tpu.memory_space<vmem>>, vector<1x32xf32>
    %166 = vector.broadcast %165 : vector<1x32xf32> to vector<16x32xf32>
    %167 = arith.addf %164, %166 : vector<16x32xf32>
    %168 = arith.addf %167, %155 : vector<16x32xf32>
    %169 = vector.extract_strided_slice %6 {offsets = [2, 0], sizes = [1, 32], strides = [1, 1]} : vector<3x32xf32> to vector<1x32xf32>
    %170 = vector.extract_strided_slice %7 {offsets = [2, 0], sizes = [1, 32], strides = [1, 1]} : vector<3x32xf32> to vector<1x32xf32>
    %cst_75 = arith.constant dense<0.000000e+00> : vector<16xf32>
    %171 = vector.multi_reduction <add>, %168, %cst_75 [1] : vector<16x32xf32> to vector<16xf32>
    %172 = vector.shape_cast %171 : vector<16xf32> to vector<16x1xf32>
    %cst_76 = arith.constant 3.200000e+01 : f32
    %173 = vector.broadcast %cst_76 : f32 to vector<16x1xf32>
    %174 = arith.divf %172, %173 : vector<16x1xf32>
    %175 = vector.broadcast %174 : vector<16x1xf32> to vector<16x32xf32>
    %176 = arith.subf %168, %175 : vector<16x32xf32>
    %177 = arith.mulf %176, %176 : vector<16x32xf32>
    %cst_77 = arith.constant dense<0.000000e+00> : vector<16xf32>
    %178 = vector.multi_reduction <add>, %177, %cst_77 [1] : vector<16x32xf32> to vector<16xf32>
    %179 = vector.shape_cast %178 : vector<16xf32> to vector<16x1xf32>
    %cst_78 = arith.constant 3.200000e+01 : f32
    %180 = vector.broadcast %cst_78 : f32 to vector<16x1xf32>
    %181 = arith.divf %179, %180 : vector<16x1xf32>
    %cst_79 = arith.constant 9.99999974E-6 : f32
    %182 = vector.broadcast %cst_79 : f32 to vector<16x1xf32>
    %183 = arith.addf %181, %182 : vector<16x1xf32>
    %184 = math.rsqrt %183 : vector<16x1xf32>
    %185 = vector.broadcast %184 : vector<16x1xf32> to vector<16x32xf32>
    %186 = arith.mulf %176, %185 : vector<16x32xf32>
    %187 = vector.broadcast %169 : vector<1x32xf32> to vector<16x32xf32>
    %188 = arith.mulf %186, %187 : vector<16x32xf32>
    %189 = vector.broadcast %170 : vector<1x32xf32> to vector<16x32xf32>
    %190 = arith.addf %188, %189 : vector<16x32xf32>
    %191 = vector.shape_cast %190 : vector<16x32xf32> to vector<2x8x32xf32>
    %c0_80 = arith.constant 0 : index
    %c0_81 = arith.constant 0 : index
    %c0_82 = arith.constant 0 : index
    %192 = vector.load %arg17[%c0_80, %c0_81, %c0_82] : memref<2x8x32xf32, #tpu.memory_space<vmem>>, vector<2x8x32xf32>
    tpu.vector_store %arg17[%c0_80, %c0_81, %c0_82], %191 {strides = array<i32>} : memref<2x8x32xf32, #tpu.memory_space<vmem>>, vector<2x8x32xf32>,
    return
  }
}

</mosaic_0001>

<llo_original>
// kernel: decoder_block.1
$region0: #{decoder_block.1}
  #allocation0 [shape = 'u32[]', space=smem, size = 0x4, offset = 0x4, fixed_abs, tag = 'smem constant byte address 0x4 - core index']
  #allocation1 [shape = 'u32[144,128]{1,0:T(1,128)}', space=vmem, size = 0x12000, scoped, tag = 'internal scratch']
  %s0 = inlined_call_operand.vmem [shape: f32[2,8,32], index: 0, kind: input, shape index: {}]
  %s1 = inlined_call_operand.vmem [shape: f32[2,8,32], index: 1, kind: input, shape index: {}]
  %s2 = inlined_call_operand.vmem [shape: f32[2,8,32], index: 2, kind: input, shape index: {}]
  %s3 = inlined_call_operand.vmem [shape: f32[16,16], index: 3, kind: input, shape index: {}]
  %s4 = inlined_call_operand.vmem [shape: f32[16,16], index: 4, kind: input, shape index: {}]
  %s5 = inlined_call_operand.vmem [shape: f32[32,96], index: 5, kind: input, shape index: {}]
  %s6 = inlined_call_operand.vmem [shape: f32[1,96], index: 6, kind: input, shape index: {}]
  %s7 = inlined_call_operand.vmem [shape: f32[32,32], index: 7, kind: input, shape index: {}]
  %s8 = inlined_call_operand.vmem [shape: f32[1,32], index: 8, kind: input, shape index: {}]
  %s9 = inlined_call_operand.vmem [shape: f32[4,32,32], index: 9, kind: input, shape index: {}]
  %s10 = inlined_call_operand.vmem [shape: f32[4,32], index: 10, kind: input, shape index: {}]
  %s11 = inlined_call_operand.vmem [shape: f32[3,32], index: 11, kind: input, shape index: {}]
  %s12 = inlined_call_operand.vmem [shape: f32[3,32], index: 12, kind: input, shape index: {}]
  %s13 = inlined_call_operand.vmem [shape: f32[32,128], index: 13, kind: input, shape index: {}]
  %s14 = inlined_call_operand.vmem [shape: f32[1,128], index: 14, kind: input, shape index: {}]
  %s15 = inlined_call_operand.vmem [shape: f32[128,32], index: 15, kind: input, shape index: {}]
  %s16 = inlined_call_operand.vmem [shape: f32[1,32], index: 16, kind: input, shape index: {}]
  %s17 = inlined_call_operand.hbm [shape: f32[2,8,32], index: 17, kind: output, shape index: {}]
  %s18 = sld [smem:[#allocation0]]
  $region78: #{decoder_block.1} parent=0
    _
  %s20 = ssub.s32 1, %s18
  %s21 = scalar_select 0, %s20, %s18
  $region1: #{decoder_block.1} parent=0
    #allocation2 [shape = 'u8[8192]{0}', space=vmem, size = 0x2000, scoped, tag = 'output window, operand 0, single buffered']
    #allocation3 [shape = 's32[1]{0}', space=sflag, size = 0x4, scoped, tag = 'scoped memory for decoder_block.1']
    %22 = vsyncpa [#allocation3], 0
    // Predicated region
    $region2: #{decoder_block.1} parent=1 // pred_check
      _
    $region3: #{decoder_block.1} parent=1 // pred_check_branch
      %24 = sbr.rel (0) target = $region5
    $region4: #{decoder_block.1} parent=1 // pred_region
      _
    $region5: #{decoder_block.1} parent=1 // pred_fallthru
      _
    // Predicated region
    $region6: #{decoder_block.1} parent=1 // pred_check
      _
    $region7: #{decoder_block.1} parent=1 // pred_check_branch
      %26 = sbr.rel (0) target = $region9
    $region8: #{decoder_block.1} parent=1 // pred_region
      _
    $region9: #{decoder_block.1} parent=1 // pred_fallthru
      _
    // Predicated region
    $region10: #{decoder_block.1} parent=1 // pred_check
      _
    $region11: #{decoder_block.1} parent=1 // pred_check_branch
      %28 = sbr.rel (0) target = $region13
    $region12: #{decoder_block.1} parent=1 // pred_region
      _
    $region13: #{decoder_block.1} parent=1 // pred_fallthru
      _
    // Predicated region
    $region14: #{decoder_block.1} parent=1 // pred_check
      _
    $region15: #{decoder_block.1} parent=1 // pred_check_branch
      %30 = sbr.rel (0) target = $region17
    $region16: #{decoder_block.1} parent=1 // pred_region
      _
    $region17: #{decoder_block.1} parent=1 // pred_fallthru
      _
    // Predicated region
    $region18: #{decoder_block.1} parent=1 // pred_check
      _
    $region19: #{decoder_block.1} parent=1 // pred_check_branch
      %32 = sbr.rel (0) target = $region21
    $region20: #{decoder_block.1} parent=1 // pred_region
      _
    $region21: #{decoder_block.1} parent=1 // pred_fallthru
      _
    // Predicated region
    $region22: #{decoder_block.1} parent=1 // pred_check
      _
    $region23: #{decoder_block.1} parent=1 // pred_check_branch
      %34 = sbr.rel (0) target = $region25
    $region24: #{decoder_block.1} parent=1 // pred_region
      _
    $region25: #{decoder_block.1} parent=1 // pred_fallthru
      _
    // Predicated region
    $region26: #{decoder_block.1} parent=1 // pred_check
      _
    $region27: #{decoder_block.1} parent=1 // pred_check_branch
      %36 = sbr.rel (0) target = $region29
    $region28: #{decoder_block.1} parent=1 // pred_region
      _
    $region29: #{decoder_block.1} parent=1 // pred_fallthru
      _
    // Predicated region
    $region30: #{decoder_block.1} parent=1 // pred_check
      _
    $region31: #{decoder_block.1} parent=1 // pred_check_branch
      %38 = sbr.rel (0) target = $region33
    $region32: #{decoder_block.1} parent=1 // pred_region
      _
    $region33: #{decoder_block.1} parent=1 // pred_fallthru
      _
    // Predicated region
    $region34: #{decoder_block.1} parent=1 // pred_check
      _
    $region35: #{decoder_block.1} parent=1 // pred_check_branch
      %40 = sbr.rel (0) target = $region37
    $region36: #{decoder_block.1} parent=1 // pred_region
      _
    $region37: #{decoder_block.1} parent=1 // pred_fallthru
      _
    // Predicated region
    $region38: #{decoder_block.1} parent=1 // pred_check
      _
    $region39: #{decoder_block.1} parent=1 // pred_check_branch
      %42 = sbr.rel (0) target = $region41
    $region40: #{decoder_block.1} parent=1 // pred_region
      _
    $region41: #{decoder_block.1} parent=1 // pred_fallthru
      _
    // Predicated region
    $region42: #{decoder_block.1} parent=1 // pred_check
      _
    $region43: #{decoder_block.1} parent=1 // pred_check_branch
      %44 = sbr.rel (0) target = $region45
    $region44: #{decoder_block.1} parent=1 // pred_region
      _
    $region45: #{decoder_block.1} parent=1 // pred_fallthru
      _
    // Predicated region
    $region46: #{decoder_block.1} parent=1 // pred_check
      _
    $region47: #{decoder_block.1} parent=1 // pred_check_branch
      %46 = sbr.rel (0) target = $region49
    $region48: #{decoder_block.1} parent=1 // pred_region
      _
    $region49: #{decoder_block.1} parent=1 // pred_fallthru
      _
    // Predicated region
    $region50: #{decoder_block.1} parent=1 // pred_check
      _
    $region51: #{decoder_block.1} parent=1 // pred_check_branch
      %48 = sbr.rel (0) target = $region53
    $region52: #{decoder_block.1} parent=1 // pred_region
      _
    $region53: #{decoder_block.1} parent=1 // pred_fallthru
      _
    // Predicated region
    $region54: #{decoder_block.1} parent=1 // pred_check
      _
    $region55: #{decoder_block.1} parent=1 // pred_check_branch
      %50 = sbr.rel (0) target = $region57
    $region56: #{decoder_block.1} parent=1 // pred_region
      _
    $region57: #{decoder_block.1} parent=1 // pred_fallthru
      _
    // Predicated region
    $region58: #{decoder_block.1} parent=1 // pred_check
      _
    $region59: #{decoder_block.1} parent=1 // pred_check_branch
      %52 = sbr.rel (0) target = $region61
    $region60: #{decoder_block.1} parent=1 // pred_region
      _
    $region61: #{decoder_block.1} parent=1 // pred_fallthru
      _
    // Predicated region
    $region62: #{decoder_block.1} parent=1 // pred_check
      _
    $region63: #{decoder_block.1} parent=1 // pred_check_branch
      %54 = sbr.rel (0) target = $region65
    $region64: #{decoder_block.1} parent=1 // pred_region
      _
    $region65: #{decoder_block.1} parent=1 // pred_fallthru
      _
    // Predicated region
    $region66: #{decoder_block.1} parent=1 // pred_check
      _
    $region67: #{decoder_block.1} parent=1 // pred_check_branch
      %56 = sbr.rel (0) target = $region69
    $region68: #{decoder_block.1} parent=1 // pred_region
      _
    $region69: #{decoder_block.1} parent=1 // pred_fallthru
      _
    %v57 = vld [vmem:[%s0] sm:$0xff]
    %v58 = vld [vmem:[%s0 + $0x8] sm:$0xff]
    %v59 = vld [vmem:[%s2] sm:$0xff]
    %v60 = vld [vmem:[%s2 + $0x8] sm:$0xff]
    %v61 = vld [vmem:[%s1] sm:$0xff]
    %v62 = vld [vmem:[%s1 + $0x8] sm:$0xff]
    %v63 = vld [vmem:[%s11] sm:$0x7]
    %v64 = vld [vmem:[%s12] sm:$0x7]
    %v65 = vld [vmem:[%s10] sm:$0xf]
    %v66 = vld [vmem:[%s5] sm:$0xff]
    %v67 = vld [vmem:[%s5 + $0x8] sm:$0xff]
    %v68 = vld [vmem:[%s5 + $0x10] sm:$0xff]
    %v69 = vld [vmem:[%s5 + $0x18] sm:$0xff]
    %v70 = vld [vmem:[%s6] sm:$0x1]
    %v72 = vlaneseq
    %v73 = vshrl.u32 %v72, 7
    %v74 = vsub.s32 0, %v73
    %v75 = vrot.slane %v70, %v74
    %vm77 = vcmask 261120
    %v79 = vsel %vm77, %v57, 0
    %v82 = vsel %vm77, %v58, 0
    %84 = vmatprep.subr.mxu0 0.0
    %85 = vmatpush1.msra.mxu0 %v66
    %86 = vmatprep.subr.mxu0 0.0
    %87 = vmatpush1.msra.mxu0 %v67
    %88 = vmatprep.subr.mxu0 0.0
    %89 = vmatpush1.msra.mxu0 %v68
    %90 = vmatprep.subr.mxu0 0.0
    %91 = vmatpush1.msra.mxu0 %v69
    %92 = vmatprep.subr.mxu0 0.0
    %93 = vmatpush1.msra.mxu0 0.0
    %94 = vmatprep.subr.mxu0 0.0
    %95 = vmatpush1.msra.mxu0 0.0
    %96 = vmatprep.subr.mxu0 0.0
    %97 = vmatpush1.msra.mxu0 0.0
    %98 = vmatprep.subr.mxu0 0.0
    %99 = vmatpush1.msra.mxu0 0.0
    %100 = vmatprep.subr.mxu0 0.0
    %101 = vmatpush1.msra.mxu0 0.0
    %102 = vmatprep.subr.mxu0 0.0
    %103 = vmatpush1.msra.mxu0 0.0
    %104 = vmatprep.subr.mxu0 0.0
    %105 = vmatpush1.msra.mxu0 0.0
    %106 = vmatprep.subr.mxu0 0.0
    %107 = vmatpush1.msra.mxu0 0.0
    %108 = vmatprep.subr.mxu0 0.0
    %109 = vmatpush1.msra.mxu0 0.0
    %110 = vmatprep.subr.mxu0 0.0
    %111 = vmatpush1.msra.mxu0 0.0
    %112 = vmatprep.subr.mxu0 0.0
    %113 = vmatpush1.msra.mxu0 0.0
    %114 = vmatprep.subr.mxu0 0.0
    %115 = vmatpush1.msra.mxu0 0.0
    %116 = vmatprep.subr.mxu0 0.0
    %117 = vmatpush1.msra.mxu0 0.0
    %118 = vmatprep.subr.mxu0 0.0
    %119 = vmatpush1.msra.mxu0 0.0
    %120 = vmatprep.subr.mxu0 0.0
    %121 = vmatpush1.msra.mxu0 0.0
    %122 = vmatprep.subr.mxu0 0.0
    %123 = vmatpush1.msra.mxu0 0.0
    %124 = vmatprep.subr.mxu0 0.0
    %125 = vmatpush1.msra.mxu0 0.0
    %126 = vmatprep.subr.mxu0 0.0
    %127 = vmatpush1.msra.mxu0 0.0
    %128 = vmatprep.subr.mxu0 0.0
    %129 = vmatpush1.msra.mxu0 0.0
    %130 = vmatprep.subr.mxu0 0.0
    %131 = vmatpush1.msra.mxu0 0.0
    %132 = vmatprep.subr.mxu0 0.0
    %133 = vmatpush1.msra.mxu0 0.0
    %134 = vmatprep.subr.mxu0 0.0
    %135 = vmatpush1.msra.mxu0 0.0
    %136 = vmatprep.subr.mxu0 0.0
    %137 = vmatpush1.msra.mxu0 0.0
    %138 = vmatprep.subr.mxu0 0.0
    %139 = vmatpush1.msra.mxu0 0.0
    %140 = vmatprep.subr.mxu0 0.0
    %141 = vmatpush1.msra.mxu0 0.0
    %142 = vmatprep.subr.mxu0 0.0
    %143 = vmatpush1.msra.mxu0 0.0
    %144 = vmatprep.subr.mxu0 0.0
    %145 = vmatpush1.msra.mxu0 0.0
    %146 = vmatprep.subr.mxu0 0.0
    %147 = vmatpush1.msra.mxu0 0.0
    %148 = vmatprep.mubr.f32.mxu0 0.0
    %149 = vmatmul.mubr.f32.gmra.mrb[0].mxu0 %v79
    %v150 = vpop.f32.mrb[0].mxu0
    %v151 = vadd.f32 %v75, %v150
    %v152 = vpop.f32.mrb[0].mxu0
    %153 = vmatprep.mubr.f32.mxu0 0.0
    %154 = vmatmul.mubr.f32.gmra.mrb[0].mxu0 %v82
    %v155 = vpop.f32.mrb[0].mxu0
    %v156 = vadd.f32 %v75, %v155
    %v157 = vpop.f32.mrb[0].mxu0
    %158 = vdwg.mxu0
    %v159 = vld [vmem:[%s3] sm:$0xff]
    %v160 = vld [vmem:[%s3 + $0x8] sm:$0xff]
    %v161 = vld [vmem:[%s7] sm:$0xff]
    %v162 = vld [vmem:[%s7 + $0x8] sm:$0xff]
    %v163 = vld [vmem:[%s7 + $0x10] sm:$0xff]
    %v164 = vld [vmem:[%s7 + $0x18] sm:$0xff]
    %v165 = vld [vmem:[%s8] sm:$0x1]
    %v166 = vlaneseq
    %v167 = vshrl.u32 %v166, 7
    %v168 = vadd.s32 %v167, 8
    %v169 = vadd.s32 %v167, 16
    %v170 = vadd.s32 %v167, 24
    %v171 = vadd.s32 %v167, 32
    %v172 = vadd.s32 %v167, 40
    %v173 = vadd.s32 %v167, 48
    %v174 = vadd.s32 %v167, 56
    %v175 = vcvt.s32.f32 %v167
    %v176 = vcvt.s32.f32 %v168
    %v177 = vcvt.s32.f32 %v169
    %v178 = vcvt.s32.f32 %v170
    %v179 = vcvt.s32.f32 %v171
    %v180 = vcvt.s32.f32 %v172
    %v181 = vcvt.s32.f32 %v173
    %v182 = vcvt.s32.f32 %v174
    %v183 = vlaneseq
    %v184 = vand.u32 %v183, 127
    %v185 = vcvt.s32.f32 %v184
    %v186 = vrcp.pop 16.0
    %v187 = vmul.f32 %v175, %v186
    %v188 = vmul.f32 %v176, %v186
    %v189 = vmul.f32 %v177, %v186
    %v190 = vmul.f32 %v178, %v186
    %v191 = vmul.f32 %v179, %v186
    %v192 = vmul.f32 %v180, %v186
    %v193 = vmul.f32 %v181, %v186
    %v194 = vmul.f32 %v182, %v186
    %v195 = vfloor.f32 %v187
    %v196 = vfloor.f32 %v188
    %v197 = vfloor.f32 %v189
    %v198 = vfloor.f32 %v190
    %v199 = vfloor.f32 %v191
    %v200 = vfloor.f32 %v192
    %v201 = vfloor.f32 %v193
    %v202 = vfloor.f32 %v194
    %v203 = vrcp.pop 8.0
    %v204 = vmul.f32 %v185, %v203
    %v205 = vfloor.f32 %v204
    %vm206 = vcmp.eq.f32.partialorder %v195, %v205
    %vm207 = vcmp.eq.f32.partialorder %v196, %v205
    %vm208 = vcmp.eq.f32.partialorder %v197, %v205
    %vm209 = vcmp.eq.f32.partialorder %v198, %v205
    %vm210 = vcmp.eq.f32.partialorder %v199, %v205
    %vm211 = vcmp.eq.f32.partialorder %v200, %v205
    %vm212 = vcmp.eq.f32.partialorder %v201, %v205
    %vm213 = vcmp.eq.f32.partialorder %v202, %v205
    %v214 = vsel %vm206, 1, 0
    %v215 = vsel %vm207, 1, 0
    %v216 = vsel %vm208, 1, 0
    %v217 = vsel %vm209, 1, 0
    %v218 = vsel %vm210, 1, 0
    %v219 = vsel %vm211, 1, 0
    %v220 = vsel %vm212, 1, 0
    %v221 = vsel %vm213, 1, 0
    %v222 = vcvt.s32.f32 %v214
    %v223 = vcvt.s32.f32 %v215
    %v224 = vcvt.s32.f32 %v216
    %v225 = vcvt.s32.f32 %v217
    %v226 = vcvt.s32.f32 %v218
    %v227 = vcvt.s32.f32 %v219
    %v228 = vcvt.s32.f32 %v220
    %v229 = vcvt.s32.f32 %v221
    %238 = vrot.lane.b32.xlu0 %v222, 32
    %v239 = vpop.permute.xlu0 %238
    %240 = vrot.lane.b32.xlu0 %v223, 32
    %v241 = vpop.permute.xlu0 %240
    %242 = vrot.lane.b32.xlu0 %v224, 32
    %v243 = vpop.permute.xlu0 %242
    %244 = vrot.lane.b32.xlu0 %v225, 32
    %v245 = vpop.permute.xlu0 %244
    %246 = vrot.lane.b32.xlu0 %v226, 32
    %v247 = vpop.permute.xlu0 %246
    %248 = vrot.lane.b32.xlu0 %v227, 32
    %v249 = vpop.permute.xlu0 %248
    %250 = vrot.lane.b32.xlu0 %v228, 32
    %v251 = vpop.permute.xlu0 %250
    %252 = vrot.lane.b32.xlu0 %v229, 32
    %v253 = vpop.permute.xlu0 %252
    %v262 = vmul.f32 %v151, %v239
    %v263 = vmul.f32 %v156, %v241
    %v264 = vmul.f32 %v151, %v243
    %v265 = vmul.f32 %v156, %v245
    %v266 = vmul.f32 %v151, %v247
    %v267 = vmul.f32 %v156, %v249
    %v268 = vmul.f32 %v151, %v251
    %v269 = vmul.f32 %v156, %v253
    %270 = vrot.lane.b32.xlu0 %v222, 64
    %v271 = vpop.permute.xlu0 %270
    %272 = vrot.lane.b32.xlu0 %v223, 64
    %v273 = vpop.permute.xlu0 %272
    %274 = vrot.lane.b32.xlu0 %v224, 64
    %v275 = vpop.permute.xlu0 %274
    %276 = vrot.lane.b32.xlu0 %v225, 64
    %v277 = vpop.permute.xlu0 %276
    %278 = vrot.lane.b32.xlu0 %v226, 64
    %v279 = vpop.permute.xlu0 %278
    %280 = vrot.lane.b32.xlu0 %v227, 64
    %v281 = vpop.permute.xlu0 %280
    %282 = vrot.lane.b32.xlu0 %v228, 64
    %v283 = vpop.permute.xlu0 %282
    %284 = vrot.lane.b32.xlu0 %v229, 64
    %v285 = vpop.permute.xlu0 %284
    %v294 = vmul.f32 %v151, %v271
    %v295 = vmul.f32 %v156, %v273
    %v296 = vmul.f32 %v151, %v275
    %v297 = vmul.f32 %v156, %v277
    %v298 = vmul.f32 %v151, %v279
    %v299 = vmul.f32 %v156, %v281
    %v300 = vmul.f32 %v151, %v283
    %v301 = vmul.f32 %v156, %v285
    %310 = vrot.lane.b32.xlu0 %v262, 96
    %v311 = vpop.permute.xlu0 %310
    %312 = vrot.lane.b32.xlu0 %v263, 96
    %v313 = vpop.permute.xlu0 %312
    %314 = vrot.lane.b32.xlu0 %v264, 96
    %v315 = vpop.permute.xlu0 %314
    %316 = vrot.lane.b32.xlu0 %v265, 96
    %v317 = vpop.permute.xlu0 %316
    %318 = vrot.lane.b32.xlu0 %v266, 96
    %v319 = vpop.permute.xlu0 %318
    %320 = vrot.lane.b32.xlu0 %v267, 96
    %v321 = vpop.permute.xlu0 %320
    %322 = vrot.lane.b32.xlu0 %v268, 96
    %v323 = vpop.permute.xlu0 %322
    %324 = vrot.lane.b32.xlu0 %v269, 96
    %v325 = vpop.permute.xlu0 %324
    %v327 = vsel %vm77, %v151, 0
    %v330 = vsel %vm77, %v156, 0
    %v332 = vsel %vm77, %v311, 0
    %v334 = vsel %vm77, %v313, 0
    %v336 = vsel %vm77, %v315, 0
    %v338 = vsel %vm77, %v317, 0
    %v340 = vsel %vm77, %v319, 0
    %v342 = vsel %vm77, %v321, 0
    %v344 = vsel %vm77, %v323, 0
    %v346 = vsel %vm77, %v325, 0
    %348 = vmatprep.subr.mxu0 0.0
    %349 = vmatpush1.xpose.msra.mxu0 %v332
    %350 = vmatprep.subr.mxu0 0.0
    %351 = vmatpush1.xpose.msra.mxu0 %v334
    %352 = vmatprep.subr.mxu0 0.0
    %353 = vmatpush1.xpose.msra.mxu0 %v336
    %354 = vmatprep.subr.mxu0 0.0
    %355 = vmatpush1.xpose.msra.mxu0 %v338
    %356 = vmatprep.subr.mxu0 0.0
    %357 = vmatpush1.xpose.msra.mxu0 %v340
    %358 = vmatprep.subr.mxu0 0.0
    %359 = vmatpush1.xpose.msra.mxu0 %v342
    %360 = vmatprep.subr.mxu0 0.0
    %361 = vmatpush1.xpose.msra.mxu0 %v344
    %362 = vmatprep.subr.mxu0 0.0
    %363 = vmatpush1.xpose.msra.mxu0 %v346
    %364 = vmatprep.subr.mxu0 0.0
    %365 = vmatpush1.xpose.msra.mxu0 0.0
    %366 = vmatprep.subr.mxu0 0.0
    %367 = vmatpush1.xpose.msra.mxu0 0.0
    %368 = vmatprep.subr.mxu0 0.0
    %369 = vmatpush1.xpose.msra.mxu0 0.0
    %370 = vmatprep.subr.mxu0 0.0
    %371 = vmatpush1.xpose.msra.mxu0 0.0
    %372 = vmatprep.subr.mxu0 0.0
    %373 = vmatpush1.xpose.msra.mxu0 0.0
    %374 = vmatprep.subr.mxu0 0.0
    %375 = vmatpush1.xpose.msra.mxu0 0.0
    %376 = vmatprep.subr.mxu0 0.0
    %377 = vmatpush1.xpose.msra.mxu0 0.0
    %378 = vmatprep.subr.mxu0 0.0
    %379 = vmatpush1.xpose.msra.mxu0 0.0
    %380 = vmatprep.subr.mxu0 0.0
    %381 = vmatpush1.xpose.msra.mxu0 0.0
    %382 = vmatprep.subr.mxu0 0.0
    %383 = vmatpush1.xpose.msra.mxu0 0.0
    %384 = vmatprep.subr.mxu0 0.0
    %385 = vmatpush1.xpose.msra.mxu0 0.0
    %386 = vmatprep.subr.mxu0 0.0
    %387 = vmatpush1.xpose.msra.mxu0 0.0
    %388 = vmatprep.subr.mxu0 0.0
    %389 = vmatpush1.xpose.msra.mxu0 0.0
    %390 = vmatprep.subr.mxu0 0.0
    %391 = vmatpush1.xpose.msra.mxu0 0.0
    %392 = vmatprep.subr.mxu0 0.0
    %393 = vmatpush1.xpose.msra.mxu0 0.0
    %394 = vmatprep.subr.mxu0 0.0
    %395 = vmatpush1.xpose.msra.mxu0 0.0
    %396 = vmatprep.subr.mxu0 0.0
    %397 = vmatpush1.xpose.msra.mxu0 0.0
    %398 = vmatprep.subr.mxu0 0.0
    %399 = vmatpush1.xpose.msra.mxu0 0.0
    %400 = vmatprep.subr.mxu0 0.0
    %401 = vmatpush1.xpose.msra.mxu0 0.0
    %402 = vmatprep.subr.mxu0 0.0
    %403 = vmatpush1.xpose.msra.mxu0 0.0
    %404 = vmatprep.subr.mxu0 0.0
    %405 = vmatpush1.xpose.msra.mxu0 0.0
    %406 = vmatprep.subr.mxu0 0.0
    %407 = vmatpush1.xpose.msra.mxu0 0.0
    %408 = vmatprep.subr.mxu0 0.0
    %409 = vmatpush1.xpose.msra.mxu0 0.0
    %410 = vmatprep.subr.mxu0 0.0
    %411 = vmatpush1.xpose.msra.mxu0 0.0
    %412 = vmatprep.mubr.f32.mxu0 0.0
    %413 = vmatmul.mubr.f32.gmra.mrb[0].mxu0 %v327
    %v414 = vpop.f32.mrb[0].mxu0
    %v415 = vadd.f32 0.0, %v414
    %v416 = vpop.f32.mrb[0].mxu0
    %417 = vmatprep.mubr.f32.mxu0 0.0
    %418 = vmatmul.mubr.f32.gmra.mrb[0].mxu0 %v330
    %v419 = vpop.f32.mrb[0].mxu0
    %v420 = vadd.f32 0.0, %v419
    %v421 = vpop.f32.mrb[0].mxu0
    %422 = vdwg.mxu0
    %v423 = vmul.f32 %v415, 0.35355338
    %v424 = vmul.f32 %v420, 0.35355338
    %427 = vrot.lane.b32.xlu0 %v159, 16
    %v428 = vpop.permute.xlu0 %427
    %429 = vrot.lane.b32.xlu0 %v160, 16
    %v430 = vpop.permute.xlu0 %429
    %433 = vrot.lane.b32.xlu0 %v159, 32
    %v434 = vpop.permute.xlu0 %433
    %435 = vrot.lane.b32.xlu0 %v160, 32
    %v436 = vpop.permute.xlu0 %435
    %439 = vrot.lane.b32.xlu0 %v159, 48
    %v440 = vpop.permute.xlu0 %439
    %441 = vrot.lane.b32.xlu0 %v160, 48
    %v442 = vpop.permute.xlu0 %441
    %vm445 = vcmask 130048
    %v446 = vsel %vm445, %v159, %v428
    %v447 = vsel %vm445, %v160, %v430
    %v448 = vsel %vm77, %v446, %v434
    %v449 = vsel %vm77, %v447, %v436
    %vm450 = vcmask 392192
    %v451 = vsel %vm450, %v448, %v440
    %v452 = vsel %vm450, %v449, %v442
    %v453 = vadd.f32 %v423, %v451
    %v454 = vadd.f32 %v424, %v452
    %vm455 = vcmask 523264
    %v456 = vsel %vm455, %v453, -inf
    %457 = vmax.xlane.f32.xlu0 %v456
    %v458 = vpop.xlane.xlu0 %457
    %v459 = vsel %vm455, %v454, -inf
    %460 = vmax.xlane.f32.xlu0 %v459
    %v461 = vpop.xlane.xlu0 %460
    %v462 = vsub.f32 %v453, %v458
    %v463 = vsub.f32 %v454, %v461
    %v464 = vmul.f32 %v462, 1.442695
    %v465 = vpow.pop %v464
    %v466 = vmul.f32 %v463, 1.442695
    %v467 = vpow.pop %v466
    %476 = vrot.lane.b32.xlu0 %v294, 64
    %v477 = vpop.permute.xlu0 %476
    %478 = vrot.lane.b32.xlu0 %v295, 64
    %v479 = vpop.permute.xlu0 %478
    %480 = vrot.lane.b32.xlu0 %v296, 64
    %v481 = vpop.permute.xlu0 %480
    %482 = vrot.lane.b32.xlu0 %v297, 64
    %v483 = vpop.permute.xlu0 %482
    %484 = vrot.lane.b32.xlu0 %v298, 64
    %v485 = vpop.permute.xlu0 %484
    %486 = vrot.lane.b32.xlu0 %v299, 64
    %v487 = vpop.permute.xlu0 %486
    %488 = vrot.lane.b32.xlu0 %v300, 64
    %v489 = vpop.permute.xlu0 %488
    %490 = vrot.lane.b32.xlu0 %v301, 64
    %v491 = vpop.permute.xlu0 %490
    %v501 = vsel %vm455, %v465, 0
    %v504 = vsel %vm455, %v467, 0
    %506 = vmatprep.subr.mxu0 0.0
    %507 = vmatpush1.msra.mxu0 %v477
    %508 = vmatprep.subr.mxu0 0.0
    %509 = vmatpush1.msra.mxu0 %v479
    %510 = vmatprep.subr.mxu0 0.0
    %511 = vmatpush1.msra.mxu0 %v481
    %512 = vmatprep.subr.mxu0 0.0
    %513 = vmatpush1.msra.mxu0 %v483
    %514 = vmatprep.subr.mxu0 0.0
    %515 = vmatpush1.msra.mxu0 %v485
    %516 = vmatprep.subr.mxu0 0.0
    %517 = vmatpush1.msra.mxu0 %v487
    %518 = vmatprep.subr.mxu0 0.0
    %519 = vmatpush1.msra.mxu0 %v489
    %520 = vmatprep.subr.mxu0 0.0
    %521 = vmatpush1.msra.mxu0 %v491
    %522 = vmatprep.subr.mxu0 0.0
    %523 = vmatpush1.msra.mxu0 0.0
    %524 = vmatprep.subr.mxu0 0.0
    %525 = vmatpush1.msra.mxu0 0.0
    %526 = vmatprep.subr.mxu0 0.0
    %527 = vmatpush1.msra.mxu0 0.0
    %528 = vmatprep.subr.mxu0 0.0
    %529 = vmatpush1.msra.mxu0 0.0
    %530 = vmatprep.subr.mxu0 0.0
    %531 = vmatpush1.msra.mxu0 0.0
    %532 = vmatprep.subr.mxu0 0.0
    %533 = vmatpush1.msra.mxu0 0.0
    %534 = vmatprep.subr.mxu0 0.0
    %535 = vmatpush1.msra.mxu0 0.0
    %536 = vmatprep.subr.mxu0 0.0
    %537 = vmatpush1.msra.mxu0 0.0
    %538 = vmatprep.subr.mxu0 0.0
    %539 = vmatpush1.msra.mxu0 0.0
    %540 = vmatprep.subr.mxu0 0.0
    %541 = vmatpush1.msra.mxu0 0.0
    %542 = vmatprep.subr.mxu0 0.0
    %543 = vmatpush1.msra.mxu0 0.0
    %544 = vmatprep.subr.mxu0 0.0
    %545 = vmatpush1.msra.mxu0 0.0
    %546 = vmatprep.subr.mxu0 0.0
    %547 = vmatpush1.msra.mxu0 0.0
    %548 = vmatprep.subr.mxu0 0.0
    %549 = vmatpush1.msra.mxu0 0.0
    %550 = vmatprep.subr.mxu0 0.0
    %551 = vmatpush1.msra.mxu0 0.0
    %552 = vmatprep.subr.mxu0 0.0
    %553 = vmatpush1.msra.mxu0 0.0
    %554 = vmatprep.subr.mxu0 0.0
    %555 = vmatpush1.msra.mxu0 0.0
    %556 = vmatprep.subr.mxu0 0.0
    %557 = vmatpush1.msra.mxu0 0.0
    %558 = vmatprep.subr.mxu0 0.0
    %559 = vmatpush1.msra.mxu0 0.0
    %560 = vmatprep.subr.mxu0 0.0
    %561 = vmatpush1.msra.mxu0 0.0
    %562 = vmatprep.subr.mxu0 0.0
    %563 = vmatpush1.msra.mxu0 0.0
    %564 = vmatprep.subr.mxu0 0.0
    %565 = vmatpush1.msra.mxu0 0.0
    %566 = vmatprep.subr.mxu0 0.0
    %567 = vmatpush1.msra.mxu0 0.0
    %568 = vmatprep.subr.mxu0 0.0
    %569 = vmatpush1.msra.mxu0 0.0
    %570 = vmatprep.mubr.f32.mxu0 0.0
    %571 = vmatmul.mubr.f32.gmra.mrb[0].mxu0 %v501
    %v572 = vpop.f32.mrb[0].mxu0
    %v573 = vadd.f32 0.0, %v572
    %v574 = vpop.f32.mrb[0].mxu0
    %575 = vmatprep.mubr.f32.mxu0 0.0
    %576 = vmatmul.mubr.f32.gmra.mrb[0].mxu0 %v504
    %v577 = vpop.f32.mrb[0].mxu0
    %v578 = vadd.f32 0.0, %v577
    %v579 = vpop.f32.mrb[0].mxu0
    %580 = vdwg.mxu0
    %581 = vmatprep.subr.mxu0 0.0
    %582 = vmatpush1.msra.mxu0 %v222
    %583 = vmatprep.subr.mxu0 0.0
    %584 = vmatpush1.msra.mxu0 %v223
    %585 = vmatprep.subr.mxu0 0.0
    %586 = vmatpush1.msra.mxu0 %v224
    %587 = vmatprep.subr.mxu0 0.0
    %588 = vmatpush1.msra.mxu0 %v225
    %589 = vmatprep.subr.mxu0 0.0
    %590 = vmatpush1.msra.mxu0 %v226
    %591 = vmatprep.subr.mxu0 0.0
    %592 = vmatpush1.msra.mxu0 %v227
    %593 = vmatprep.subr.mxu0 0.0
    %594 = vmatpush1.msra.mxu0 %v228
    %595 = vmatprep.subr.mxu0 0.0
    %596 = vmatpush1.msra.mxu0 %v229
    %597 = vmatprep.subr.mxu0 0.0
    %598 = vmatpush1.msra.mxu0 0.0
    %599 = vmatprep.subr.mxu0 0.0
    %600 = vmatpush1.msra.mxu0 0.0
    %601 = vmatprep.subr.mxu0 0.0
    %602 = vmatpush1.msra.mxu0 0.0
    %603 = vmatprep.subr.mxu0 0.0
    %604 = vmatpush1.msra.mxu0 0.0
    %605 = vmatprep.subr.mxu0 0.0
    %606 = vmatpush1.msra.mxu0 0.0
    %607 = vmatprep.subr.mxu0 0.0
    %608 = vmatpush1.msra.mxu0 0.0
    %609 = vmatprep.subr.mxu0 0.0
    %610 = vmatpush1.msra.mxu0 0.0
    %611 = vmatprep.subr.mxu0 0.0
    %612 = vmatpush1.msra.mxu0 0.0
    %613 = vmatprep.subr.mxu0 0.0
    %614 = vmatpush1.msra.mxu0 0.0
    %615 = vmatprep.subr.mxu0 0.0
    %616 = vmatpush1.msra.mxu0 0.0
    %617 = vmatprep.subr.mxu0 0.0
    %618 = vmatpush1.msra.mxu0 0.0
    %619 = vmatprep.subr.mxu0 0.0
    %620 = vmatpush1.msra.mxu0 0.0
    %621 = vmatprep.subr.mxu0 0.0
    %622 = vmatpush1.msra.mxu0 0.0
    %623 = vmatprep.subr.mxu0 0.0
    %624 = vmatpush1.msra.mxu0 0.0
    %625 = vmatprep.subr.mxu0 0.0
    %626 = vmatpush1.msra.mxu0 0.0
    %627 = vmatprep.subr.mxu0 0.0
    %628 = vmatpush1.msra.mxu0 0.0
    %629 = vmatprep.subr.mxu0 0.0
    %630 = vmatpush1.msra.mxu0 0.0
    %631 = vmatprep.subr.mxu0 0.0
    %632 = vmatpush1.msra.mxu0 0.0
    %633 = vmatprep.subr.mxu0 0.0
    %634 = vmatpush1.msra.mxu0 0.0
    %635 = vmatprep.subr.mxu0 0.0
    %636 = vmatpush1.msra.mxu0 0.0
    %637 = vmatprep.subr.mxu0 0.0
    %638 = vmatpush1.msra.mxu0 0.0
    %639 = vmatprep.subr.mxu0 0.0
    %640 = vmatpush1.msra.mxu0 0.0
    %641 = vmatprep.subr.mxu0 0.0
    %642 = vmatpush1.msra.mxu0 0.0
    %643 = vmatprep.subr.mxu0 0.0
    %644 = vmatpush1.msra.mxu0 0.0
    %645 = vmatprep.mubr.f32.mxu0 0.0
    %646 = vmatmul.mubr.f32.gmra.mrb[0].mxu0 %v501
    %v647 = vpop.f32.mrb[0].mxu0
    %v648 = vadd.f32 0.0, %v647
    %v649 = vpop.f32.mrb[0].mxu0
    %650 = vmatprep.mubr.f32.mxu0 0.0
    %651 = vmatmul.mubr.f32.gmra.mrb[0].mxu0 %v504
    %v652 = vpop.f32.mrb[0].mxu0
    %v653 = vadd.f32 0.0, %v652
    %v654 = vpop.f32.mrb[0].mxu0
    %655 = vdwg.mxu0
    %v656 = vrcp.pop %v648
    %v657 = vrcp.pop %v653
    %v658 = vmul.f32 %v573, %v656
    %v659 = vmul.f32 %v578, %v657
    %v661 = vlaneseq
    %v662 = vshrl.u32 %v661, 7
    %v663 = vsub.s32 0, %v662
    %v664 = vrot.slane %v165, %v663
    %v667 = vsel %vm77, %v658, 0
    %v670 = vsel %vm77, %v659, 0
    %672 = vmatprep.subr.mxu0 0.0
    %673 = vmatpush1.msra.mxu0 %v161
    %674 = vmatprep.subr.mxu0 0.0
    %675 = vmatpush1.msra.mxu0 %v162
    %676 = vmatprep.subr.mxu0 0.0
    %677 = vmatpush1.msra.mxu0 %v163
    %678 = vmatprep.subr.mxu0 0.0
    %679 = vmatpush1.msra.mxu0 %v164
    %680 = vmatprep.subr.mxu0 0.0
    %681 = vmatpush1.msra.mxu0 0.0
    %682 = vmatprep.subr.mxu0 0.0
    %683 = vmatpush1.msra.mxu0 0.0
    %684 = vmatprep.subr.mxu0 0.0
    %685 = vmatpush1.msra.mxu0 0.0
    %686 = vmatprep.subr.mxu0 0.0
    %687 = vmatpush1.msra.mxu0 0.0
    %688 = vmatprep.subr.mxu0 0.0
    %689 = vmatpush1.msra.mxu0 0.0
    %690 = vmatprep.subr.mxu0 0.0
    %691 = vmatpush1.msra.mxu0 0.0
    %692 = vmatprep.subr.mxu0 0.0
    %693 = vmatpush1.msra.mxu0 0.0
    %694 = vmatprep.subr.mxu0 0.0
    %695 = vmatpush1.msra.mxu0 0.0
    %696 = vmatprep.subr.mxu0 0.0
    %697 = vmatpush1.msra.mxu0 0.0
    %698 = vmatprep.subr.mxu0 0.0
    %699 = vmatpush1.msra.mxu0 0.0
    %700 = vmatprep.subr.mxu0 0.0
    %701 = vmatpush1.msra.mxu0 0.0
    %702 = vmatprep.subr.mxu0 0.0
    %703 = vmatpush1.msra.mxu0 0.0
    %704 = vmatprep.subr.mxu0 0.0
    %705 = vmatpush1.msra.mxu0 0.0
    %706 = vmatprep.subr.mxu0 0.0
    %707 = vmatpush1.msra.mxu0 0.0
    %708 = vmatprep.subr.mxu0 0.0
    %709 = vmatpush1.msra.mxu0 0.0
    %710 = vmatprep.subr.mxu0 0.0
    %711 = vmatpush1.msra.mxu0 0.0
    %712 = vmatprep.subr.mxu0 0.0
    %713 = vmatpush1.msra.mxu0 0.0
    %714 = vmatprep.subr.mxu0 0.0
    %715 = vmatpush1.msra.mxu0 0.0
    %716 = vmatprep.subr.mxu0 0.0
    %717 = vmatpush1.msra.mxu0 0.0
    %718 = vmatprep.subr.mxu0 0.0
    %719 = vmatpush1.msra.mxu0 0.0
    %720 = vmatprep.subr.mxu0 0.0
    %721 = vmatpush1.msra.mxu0 0.0
    %722 = vmatprep.subr.mxu0 0.0
    %723 = vmatpush1.msra.mxu0 0.0
    %724 = vmatprep.subr.mxu0 0.0
    %725 = vmatpush1.msra.mxu0 0.0
    %726 = vmatprep.subr.mxu0 0.0
    %727 = vmatpush1.msra.mxu0 0.0
    %728 = vmatprep.subr.mxu0 0.0
    %729 = vmatpush1.msra.mxu0 0.0
    %730 = vmatprep.subr.mxu0 0.0
    %731 = vmatpush1.msra.mxu0 0.0
    %732 = vmatprep.subr.mxu0 0.0
    %733 = vmatpush1.msra.mxu0 0.0
    %734 = vmatprep.subr.mxu0 0.0
    %735 = vmatpush1.msra.mxu0 0.0
    %736 = vmatprep.mubr.f32.mxu0 0.0
    %737 = vmatmul.mubr.f32.gmra.mrb[0].mxu0 %v667
    %v738 = vpop.f32.mrb[0].mxu0
    %v739 = vadd.f32 %v664, %v738
    %v740 = vpop.f32.mrb[0].mxu0
    %741 = vmatprep.mubr.f32.mxu0 0.0
    %742 = vmatmul.mubr.f32.gmra.mrb[0].mxu0 %v670
    %v743 = vpop.f32.mrb[0].mxu0
    %v744 = vadd.f32 %v664, %v743
    %v745 = vpop.f32.mrb[0].mxu0
    %746 = vdwg.mxu0
    %v747 = vadd.f32 %v57, %v739
    %v748 = vadd.f32 %v58, %v744
    %v749 = vsel %vm77, %v747, 0.0
    %750 = vadd.xlane.f32.xlu0 %v749
    %v751 = vpop.xlane.xlu0 %750
    %v752 = vsel %vm77, %v748, 0.0
    %753 = vadd.xlane.f32.xlu0 %v752
    %v754 = vpop.xlane.xlu0 %753
    %v755 = vrcp.pop 32.0
    %v756 = vmul.f32 %v751, %v755
    %v757 = vmul.f32 %v754, %v755
    %v758 = vsub.f32 %v747, %v756
    %v759 = vsub.f32 %v748, %v757
    %v760 = vmul.f32 %v758, %v758
    %v761 = vmul.f32 %v759, %v759
    %v762 = vsel %vm77, %v760, 0.0
    %763 = vadd.xlane.f32.xlu0 %v762
    %v764 = vpop.xlane.xlu0 %763
    %v765 = vsel %vm77, %v761, 0.0
    %766 = vadd.xlane.f32.xlu0 %v765
    %v767 = vpop.xlane.xlu0 %766
    %v768 = vmul.f32 %v764, %v755
    %v769 = vmul.f32 %v767, %v755
    %v770 = vadd.f32 %v768, 1e-05
    %v771 = vadd.f32 %v769, 1e-05
    %v772 = vrsqrt.pop %v770
    %v773 = vrsqrt.pop %v771
    %v774 = vmul.f32 %v758, %v772
    %v775 = vmul.f32 %v759, %v773
    %v776 = vlaneseq
    %v777 = vshrl.u32 %v776, 7
    %v778 = vsub.s32 0, %v777
    %v779 = vrot.slane %v63, %v778
    %v780 = vmul.f32 %v774, %v779
    %v781 = vmul.f32 %v775, %v779
    %v782 = vlaneseq
    %v783 = vshrl.u32 %v782, 7
    %v784 = vsub.s32 0, %v783
    %v785 = vrot.slane %v64, %v784
    %v786 = vadd.f32 %v780, %v785
    %v787 = vadd.f32 %v781, %v785
    %v788 = vld [vmem:[%s9] sm:$0xff]
    %v789 = vld [vmem:[%s9 + $0x8] sm:$0xff]
    %v790 = vld [vmem:[%s9 + $0x10] sm:$0xff]
    %v791 = vld [vmem:[%s9 + $0x18] sm:$0xff]
    %v792 = vlaneseq
    %v793 = vshrl.u32 %v792, 7
    %v794 = vsub.s32 0, %v793
    %v795 = vrot.slane %v65, %v794
    %v797 = vsel %vm77, %v786, 0
    %v800 = vsel %vm77, %v787, 0
    %802 = vmatprep.subr.mxu0 0.0
    %803 = vmatpush1.msra.mxu0 %v788
    %804 = vmatprep.subr.mxu0 0.0
    %805 = vmatpush1.msra.mxu0 %v789
    %806 = vmatprep.subr.mxu0 0.0
    %807 = vmatpush1.msra.mxu0 %v790
    %808 = vmatprep.subr.mxu0 0.0
    %809 = vmatpush1.msra.mxu0 %v791
    %810 = vmatprep.subr.mxu0 0.0
    %811 = vmatpush1.msra.mxu0 0.0
    %812 = vmatprep.subr.mxu0 0.0
    %813 = vmatpush1.msra.mxu0 0.0
    %814 = vmatprep.subr.mxu0 0.0
    %815 = vmatpush1.msra.mxu0 0.0
    %816 = vmatprep.subr.mxu0 0.0
    %817 = vmatpush1.msra.mxu0 0.0
    %818 = vmatprep.subr.mxu0 0.0
    %819 = vmatpush1.msra.mxu0 0.0
    %820 = vmatprep.subr.mxu0 0.0
    %821 = vmatpush1.msra.mxu0 0.0
    %822 = vmatprep.subr.mxu0 0.0
    %823 = vmatpush1.msra.mxu0 0.0
    %824 = vmatprep.subr.mxu0 0.0
    %825 = vmatpush1.msra.mxu0 0.0
    %826 = vmatprep.subr.mxu0 0.0
    %827 = vmatpush1.msra.mxu0 0.0
    %828 = vmatprep.subr.mxu0 0.0
    %829 = vmatpush1.msra.mxu0 0.0
    %830 = vmatprep.subr.mxu0 0.0
    %831 = vmatpush1.msra.mxu0 0.0
    %832 = vmatprep.subr.mxu0 0.0
    %833 = vmatpush1.msra.mxu0 0.0
    %834 = vmatprep.subr.mxu0 0.0
    %835 = vmatpush1.msra.mxu0 0.0
    %836 = vmatprep.subr.mxu0 0.0
    %837 = vmatpush1.msra.mxu0 0.0
    %838 = vmatprep.subr.mxu0 0.0
    %839 = vmatpush1.msra.mxu0 0.0
    %840 = vmatprep.subr.mxu0 0.0
    %841 = vmatpush1.msra.mxu0 0.0
    %842 = vmatprep.subr.mxu0 0.0
    %843 = vmatpush1.msra.mxu0 0.0
    %844 = vmatprep.subr.mxu0 0.0
    %845 = vmatpush1.msra.mxu0 0.0
    %846 = vmatprep.subr.mxu0 0.0
    %847 = vmatpush1.msra.mxu0 0.0
    %848 = vmatprep.subr.mxu0 0.0
    %849 = vmatpush1.msra.mxu0 0.0
    %850 = vmatprep.subr.mxu0 0.0
    %851 = vmatpush1.msra.mxu0 0.0
    %852 = vmatprep.subr.mxu0 0.0
    %853 = vmatpush1.msra.mxu0 0.0
    %854 = vmatprep.subr.mxu0 0.0
    %855 = vmatpush1.msra.mxu0 0.0
    %856 = vmatprep.subr.mxu0 0.0
    %857 = vmatpush1.msra.mxu0 0.0
    %858 = vmatprep.subr.mxu0 0.0
    %859 = vmatpush1.msra.mxu0 0.0
    %860 = vmatprep.subr.mxu0 0.0
    %861 = vmatpush1.msra.mxu0 0.0
    %862 = vmatprep.subr.mxu0 0.0
    %863 = vmatpush1.msra.mxu0 0.0
    %864 = vmatprep.subr.mxu0 0.0
    %865 = vmatpush1.msra.mxu0 0.0
    %866 = vmatprep.mubr.f32.mxu0 0.0
    %867 = vmatmul.mubr.f32.gmra.mrb[0].mxu0 %v797
    %v868 = vpop.f32.mrb[0].mxu0
    %v869 = vadd.f32 %v795, %v868
    %v870 = vpop.f32.mrb[0].mxu0
    %871 = vmatprep.mubr.f32.mxu0 0.0
    %872 = vmatmul.mubr.f32.gmra.mrb[0].mxu0 %v800
    %v873 = vpop.f32.mrb[0].mxu0
    %v874 = vadd.f32 %v795, %v873
    %v875 = vpop.f32.mrb[0].mxu0
    %876 = vdwg.mxu0
    %s877 = scalar_lea.vmem %s9, 32
    %v878 = vld [vmem:[%s877] sm:$0xff]
    %v879 = vld [vmem:[%s877 + $0x8] sm:$0xff]
    %v880 = vld [vmem:[%s877 + $0x10] sm:$0xff]
    %v881 = vld [vmem:[%s877 + $0x18] sm:$0xff]
    %v882 = vlaneseq
    %v883 = vshrl.u32 %v882, 7
    %v884 = vsub.s32 1, %v883
    %v885 = vrot.slane %v65, %v884
    %v887 = vsel %vm77, %v59, 0
    %v890 = vsel %vm77, %v60, 0
    %892 = vmatprep.subr.mxu0 0.0
    %893 = vmatpush1.msra.mxu0 %v878
    %894 = vmatprep.subr.mxu0 0.0
    %895 = vmatpush1.msra.mxu0 %v879
    %896 = vmatprep.subr.mxu0 0.0
    %897 = vmatpush1.msra.mxu0 %v880
    %898 = vmatprep.subr.mxu0 0.0
    %899 = vmatpush1.msra.mxu0 %v881
    %900 = vmatprep.subr.mxu0 0.0
    %901 = vmatpush1.msra.mxu0 0.0
    %902 = vmatprep.subr.mxu0 0.0
    %903 = vmatpush1.msra.mxu0 0.0
    %904 = vmatprep.subr.mxu0 0.0
    %905 = vmatpush1.msra.mxu0 0.0
    %906 = vmatprep.subr.mxu0 0.0
    %907 = vmatpush1.msra.mxu0 0.0
    %908 = vmatprep.subr.mxu0 0.0
    %909 = vmatpush1.msra.mxu0 0.0
    %910 = vmatprep.subr.mxu0 0.0
    %911 = vmatpush1.msra.mxu0 0.0
    %912 = vmatprep.subr.mxu0 0.0
    %913 = vmatpush1.msra.mxu0 0.0
    %914 = vmatprep.subr.mxu0 0.0
    %915 = vmatpush1.msra.mxu0 0.0
    %916 = vmatprep.subr.mxu0 0.0
    %917 = vmatpush1.msra.mxu0 0.0
    %918 = vmatprep.subr.mxu0 0.0
    %919 = vmatpush1.msra.mxu0 0.0
    %920 = vmatprep.subr.mxu0 0.0
    %921 = vmatpush1.msra.mxu0 0.0
    %922 = vmatprep.subr.mxu0 0.0
    %923 = vmatpush1.msra.mxu0 0.0
    %924 = vmatprep.subr.mxu0 0.0
    %925 = vmatpush1.msra.mxu0 0.0
    %926 = vmatprep.subr.mxu0 0.0
    %927 = vmatpush1.msra.mxu0 0.0
    %928 = vmatprep.subr.mxu0 0.0
    %929 = vmatpush1.msra.mxu0 0.0
    %930 = vmatprep.subr.mxu0 0.0
    %931 = vmatpush1.msra.mxu0 0.0
    %932 = vmatprep.subr.mxu0 0.0
    %933 = vmatpush1.msra.mxu0 0.0
    %934 = vmatprep.subr.mxu0 0.0
    %935 = vmatpush1.msra.mxu0 0.0
    %936 = vmatprep.subr.mxu0 0.0
    %937 = vmatpush1.msra.mxu0 0.0
    %938 = vmatprep.subr.mxu0 0.0
    %939 = vmatpush1.msra.mxu0 0.0
    %940 = vmatprep.subr.mxu0 0.0
    %941 = vmatpush1.msra.mxu0 0.0
    %942 = vmatprep.subr.mxu0 0.0
    %943 = vmatpush1.msra.mxu0 0.0
    %944 = vmatprep.subr.mxu0 0.0
    %945 = vmatpush1.msra.mxu0 0.0
    %946 = vmatprep.subr.mxu0 0.0
    %947 = vmatpush1.msra.mxu0 0.0
    %948 = vmatprep.subr.mxu0 0.0
    %949 = vmatpush1.msra.mxu0 0.0
    %950 = vmatprep.subr.mxu0 0.0
    %951 = vmatpush1.msra.mxu0 0.0
    %952 = vmatprep.subr.mxu0 0.0
    %953 = vmatpush1.msra.mxu0 0.0
    %954 = vmatprep.subr.mxu0 0.0
    %955 = vmatpush1.msra.mxu0 0.0
    %956 = vmatprep.mubr.f32.mxu0 0.0
    %957 = vmatmul.mubr.f32.gmra.mrb[0].mxu0 %v887
    %v958 = vpop.f32.mrb[0].mxu0
    %v959 = vadd.f32 %v885, %v958
    %v960 = vpop.f32.mrb[0].mxu0
    %961 = vmatprep.mubr.f32.mxu0 0.0
    %962 = vmatmul.mubr.f32.gmra.mrb[0].mxu0 %v890
    %v963 = vpop.f32.mrb[0].mxu0
    %v964 = vadd.f32 %v885, %v963
    %v965 = vpop.f32.mrb[0].mxu0
    %966 = vdwg.mxu0
    %s967 = scalar_lea.vmem %s9, 64
    %v968 = vld [vmem:[%s967] sm:$0xff]
    %v969 = vld [vmem:[%s967 + $0x8] sm:$0xff]
    %v970 = vld [vmem:[%s967 + $0x10] sm:$0xff]
    %v971 = vld [vmem:[%s967 + $0x18] sm:$0xff]
    %v972 = vlaneseq
    %v973 = vshrl.u32 %v972, 7
    %v974 = vsub.s32 2, %v973
    %v975 = vrot.slane %v65, %v974
    %v977 = vsel %vm77, %v61, 0
    %v980 = vsel %vm77, %v62, 0
    %982 = vmatprep.subr.mxu0 0.0
    %983 = vmatpush1.msra.mxu0 %v968
    %984 = vmatprep.subr.mxu0 0.0
    %985 = vmatpush1.msra.mxu0 %v969
    %986 = vmatprep.subr.mxu0 0.0
    %987 = vmatpush1.msra.mxu0 %v970
    %988 = vmatprep.subr.mxu0 0.0
    %989 = vmatpush1.msra.mxu0 %v971
    %990 = vmatprep.subr.mxu0 0.0
    %991 = vmatpush1.msra.mxu0 0.0
    %992 = vmatprep.subr.mxu0 0.0
    %993 = vmatpush1.msra.mxu0 0.0
    %994 = vmatprep.subr.mxu0 0.0
    %995 = vmatpush1.msra.mxu0 0.0
    %996 = vmatprep.subr.mxu0 0.0
    %997 = vmatpush1.msra.mxu0 0.0
    %998 = vmatprep.subr.mxu0 0.0
    %999 = vmatpush1.msra.mxu0 0.0
    %1000 = vmatprep.subr.mxu0 0.0
    %1001 = vmatpush1.msra.mxu0 0.0
    %1002 = vmatprep.subr.mxu0 0.0
    %1003 = vmatpush1.msra.mxu0 0.0
    %1004 = vmatprep.subr.mxu0 0.0
    %1005 = vmatpush1.msra.mxu0 0.0
    %1006 = vmatprep.subr.mxu0 0.0
    %1007 = vmatpush1.msra.mxu0 0.0
    %1008 = vmatprep.subr.mxu0 0.0
    %1009 = vmatpush1.msra.mxu0 0.0
    %1010 = vmatprep.subr.mxu0 0.0
    %1011 = vmatpush1.msra.mxu0 0.0
    %1012 = vmatprep.subr.mxu0 0.0
    %1013 = vmatpush1.msra.mxu0 0.0
    %1014 = vmatprep.subr.mxu0 0.0
    %1015 = vmatpush1.msra.mxu0 0.0
    %1016 = vmatprep.subr.mxu0 0.0
    %1017 = vmatpush1.msra.mxu0 0.0
    %1018 = vmatprep.subr.mxu0 0.0
    %1019 = vmatpush1.msra.mxu0 0.0
    %1020 = vmatprep.subr.mxu0 0.0
    %1021 = vmatpush1.msra.mxu0 0.0
    %1022 = vmatprep.subr.mxu0 0.0
    %1023 = vmatpush1.msra.mxu0 0.0
    %1024 = vmatprep.subr.mxu0 0.0
    %1025 = vmatpush1.msra.mxu0 0.0
    %1026 = vmatprep.subr.mxu0 0.0
    %1027 = vmatpush1.msra.mxu0 0.0
    %1028 = vmatprep.subr.mxu0 0.0
    %1029 = vmatpush1.msra.mxu0 0.0
    %1030 = vmatprep.subr.mxu0 0.0
    %1031 = vmatpush1.msra.mxu0 0.0
    %1032 = vmatprep.subr.mxu0 0.0
    %1033 = vmatpush1.msra.mxu0 0.0
    %1034 = vmatprep.subr.mxu0 0.0
    %1035 = vmatpush1.msra.mxu0 0.0
    %1036 = vmatprep.subr.mxu0 0.0
    %1037 = vmatpush1.msra.mxu0 0.0
    %1038 = vmatprep.subr.mxu0 0.0
    %1039 = vmatpush1.msra.mxu0 0.0
    %1040 = vmatprep.subr.mxu0 0.0
    %1041 = vmatpush1.msra.mxu0 0.0
    %1042 = vmatprep.subr.mxu0 0.0
    %1043 = vmatpush1.msra.mxu0 0.0
    %1044 = vmatprep.subr.mxu0 0.0
    %1045 = vmatpush1.msra.mxu0 0.0
    %1046 = vmatprep.mubr.f32.mxu0 0.0
    %1047 = vmatmul.mubr.f32.gmra.mrb[0].mxu0 %v977
    %v1048 = vpop.f32.mrb[0].mxu0
    %v1049 = vadd.f32 %v975, %v1048
    %v1050 = vpop.f32.mrb[0].mxu0
    %1051 = vmatprep.mubr.f32.mxu0 0.0
    %1052 = vmatmul.mubr.f32.gmra.mrb[0].mxu0 %v980
    %v1053 = vpop.f32.mrb[0].mxu0
    %v1054 = vadd.f32 %v975, %v1053
    %v1055 = vpop.f32.mrb[0].mxu0
    %1056 = vdwg.mxu0
    %v1057 = vld [vmem:[%s4] sm:$0xff]
    %v1058 = vld [vmem:[%s4 + $0x8] sm:$0xff]
    %s1059 = scalar_lea.vmem %s9, 96
    %v1060 = vld [vmem:[%s1059] sm:$0xff]
    %v1061 = vld [vmem:[%s1059 + $0x8] sm:$0xff]
    %v1062 = vld [vmem:[%s1059 + $0x10] sm:$0xff]
    %v1063 = vld [vmem:[%s1059 + $0x18] sm:$0xff]
    %v1064 = vmul.f32 %v959, %v222
    %v1065 = vmul.f32 %v964, %v223
    %v1066 = vmul.f32 %v959, %v224
    %v1067 = vmul.f32 %v964, %v225
    %v1068 = vmul.f32 %v959, %v226
    %v1069 = vmul.f32 %v964, %v227
    %v1070 = vmul.f32 %v959, %v228
    %v1071 = vmul.f32 %v964, %v229
    %v1072 = vmul.f32 %v1049, %v222
    %v1073 = vmul.f32 %v1054, %v223
    %v1074 = vmul.f32 %v1049, %v224
    %v1075 = vmul.f32 %v1054, %v225
    %v1076 = vmul.f32 %v1049, %v226
    %v1077 = vmul.f32 %v1054, %v227
    %v1078 = vmul.f32 %v1049, %v228
    %v1079 = vmul.f32 %v1054, %v229
    %v1081 = vsel %vm77, %v869, 0
    %v1084 = vsel %vm77, %v874, 0
    %v1087 = vsel %vm77, %v1064, 0
    %v1090 = vsel %vm77, %v1065, 0
    %v1093 = vsel %vm77, %v1066, 0
    %v1096 = vsel %vm77, %v1067, 0
    %v1099 = vsel %vm77, %v1068, 0
    %v1102 = vsel %vm77, %v1069, 0
    %v1105 = vsel %vm77, %v1070, 0
    %v1108 = vsel %vm77, %v1071, 0
    %1110 = vmatprep.subr.mxu0 0.0
    %1111 = vmatpush1.xpose.msra.mxu0 %v1087
    %1112 = vmatprep.subr.mxu0 0.0
    %1113 = vmatpush1.xpose.msra.mxu0 %v1090
    %1114 = vmatprep.subr.mxu0 0.0
    %1115 = vmatpush1.xpose.msra.mxu0 %v1093
    %1116 = vmatprep.subr.mxu0 0.0
    %1117 = vmatpush1.xpose.msra.mxu0 %v1096
    %1118 = vmatprep.subr.mxu0 0.0
    %1119 = vmatpush1.xpose.msra.mxu0 %v1099
    %1120 = vmatprep.subr.mxu0 0.0
    %1121 = vmatpush1.xpose.msra.mxu0 %v1102
    %1122 = vmatprep.subr.mxu0 0.0
    %1123 = vmatpush1.xpose.msra.mxu0 %v1105
    %1124 = vmatprep.subr.mxu0 0.0
    %1125 = vmatpush1.xpose.msra.mxu0 %v1108
    %1126 = vmatprep.subr.mxu0 0.0
    %1127 = vmatpush1.xpose.msra.mxu0 0.0
    %1128 = vmatprep.subr.mxu0 0.0
    %1129 = vmatpush1.xpose.msra.mxu0 0.0
    %1130 = vmatprep.subr.mxu0 0.0
    %1131 = vmatpush1.xpose.msra.mxu0 0.0
    %1132 = vmatprep.subr.mxu0 0.0
    %1133 = vmatpush1.xpose.msra.mxu0 0.0
    %1134 = vmatprep.subr.mxu0 0.0
    %1135 = vmatpush1.xpose.msra.mxu0 0.0
    %1136 = vmatprep.subr.mxu0 0.0
    %1137 = vmatpush1.xpose.msra.mxu0 0.0
    %1138 = vmatprep.subr.mxu0 0.0
    %1139 = vmatpush1.xpose.msra.mxu0 0.0
    %1140 = vmatprep.subr.mxu0 0.0
    %1141 = vmatpush1.xpose.msra.mxu0 0.0
    %1142 = vmatprep.subr.mxu0 0.0
    %1143 = vmatpush1.xpose.msra.mxu0 0.0
    %1144 = vmatprep.subr.mxu0 0.0
    %1145 = vmatpush1.xpose.msra.mxu0 0.0
    %1146 = vmatprep.subr.mxu0 0.0
    %1147 = vmatpush1.xpose.msra.mxu0 0.0
    %1148 = vmatprep.subr.mxu0 0.0
    %1149 = vmatpush1.xpose.msra.mxu0 0.0
    %1150 = vmatprep.subr.mxu0 0.0
    %1151 = vmatpush1.xpose.msra.mxu0 0.0
    %1152 = vmatprep.subr.mxu0 0.0
    %1153 = vmatpush1.xpose.msra.mxu0 0.0
    %1154 = vmatprep.subr.mxu0 0.0
    %1155 = vmatpush1.xpose.msra.mxu0 0.0
    %1156 = vmatprep.subr.mxu0 0.0
    %1157 = vmatpush1.xpose.msra.mxu0 0.0
    %1158 = vmatprep.subr.mxu0 0.0
    %1159 = vmatpush1.xpose.msra.mxu0 0.0
    %1160 = vmatprep.subr.mxu0 0.0
    %1161 = vmatpush1.xpose.msra.mxu0 0.0
    %1162 = vmatprep.subr.mxu0 0.0
    %1163 = vmatpush1.xpose.msra.mxu0 0.0
    %1164 = vmatprep.subr.mxu0 0.0
    %1165 = vmatpush1.xpose.msra.mxu0 0.0
    %1166 = vmatprep.subr.mxu0 0.0
    %1167 = vmatpush1.xpose.msra.mxu0 0.0
    %1168 = vmatprep.subr.mxu0 0.0
    %1169 = vmatpush1.xpose.msra.mxu0 0.0
    %1170 = vmatprep.subr.mxu0 0.0
    %1171 = vmatpush1.xpose.msra.mxu0 0.0
    %1172 = vmatprep.subr.mxu0 0.0
    %1173 = vmatpush1.xpose.msra.mxu0 0.0
    %1174 = vmatprep.mubr.f32.mxu0 0.0
    %1175 = vmatmul.mubr.f32.gmra.mrb[0].mxu0 %v1081
    %v1176 = vpop.f32.mrb[0].mxu0
    %v1177 = vadd.f32 0.0, %v1176
    %v1178 = vpop.f32.mrb[0].mxu0
    %1179 = vmatprep.mubr.f32.mxu0 0.0
    %1180 = vmatmul.mubr.f32.gmra.mrb[0].mxu0 %v1084
    %v1181 = vpop.f32.mrb[0].mxu0
    %v1182 = vadd.f32 0.0, %v1181
    %v1183 = vpop.f32.mrb[0].mxu0
    %1184 = vdwg.mxu0
    %v1185 = vmul.f32 %v1177, 0.35355338
    %v1186 = vmul.f32 %v1182, 0.35355338
    %1189 = vrot.lane.b32.xlu0 %v1057, 16
    %v1190 = vpop.permute.xlu0 %1189
    %1191 = vrot.lane.b32.xlu0 %v1058, 16
    %v1192 = vpop.permute.xlu0 %1191
    %1195 = vrot.lane.b32.xlu0 %v1057, 32
    %v1196 = vpop.permute.xlu0 %1195
    %1197 = vrot.lane.b32.xlu0 %v1058, 32
    %v1198 = vpop.permute.xlu0 %1197
    %1201 = vrot.lane.b32.xlu0 %v1057, 48
    %v1202 = vpop.permute.xlu0 %1201
    %1203 = vrot.lane.b32.xlu0 %v1058, 48
    %v1204 = vpop.permute.xlu0 %1203
    %v1207 = vsel %vm445, %v1057, %v1190
    %v1208 = vsel %vm445, %v1058, %v1192
    %v1209 = vsel %vm77, %v1207, %v1196
    %v1210 = vsel %vm77, %v1208, %v1198
    %v1211 = vsel %vm450, %v1209, %v1202
    %v1212 = vsel %vm450, %v1210, %v1204
    %v1213 = vadd.f32 %v1185, %v1211
    %v1214 = vadd.f32 %v1186, %v1212
    %v1215 = vsel %vm455, %v1213, -inf
    %1216 = vmax.xlane.f32.xlu0 %v1215
    %v1217 = vpop.xlane.xlu0 %1216
    %v1218 = vsel %vm455, %v1214, -inf
    %1219 = vmax.xlane.f32.xlu0 %v1218
    %v1220 = vpop.xlane.xlu0 %1219
    %v1221 = vsub.f32 %v1213, %v1217
    %v1222 = vsub.f32 %v1214, %v1220
    %v1223 = vmul.f32 %v1221, 1.442695
    %v1224 = vpow.pop %v1223
    %v1225 = vmul.f32 %v1222, 1.442695
    %v1226 = vpow.pop %v1225
    %v1228 = vsel %vm455, %v1224, 0
    %v1231 = vsel %vm455, %v1226, 0
    %1233 = vmatprep.subr.mxu0 0.0
    %1234 = vmatpush1.msra.mxu0 %v1072
    %1235 = vmatprep.subr.mxu0 0.0
    %1236 = vmatpush1.msra.mxu0 %v1073
    %1237 = vmatprep.subr.mxu0 0.0
    %1238 = vmatpush1.msra.mxu0 %v1074
    %1239 = vmatprep.subr.mxu0 0.0
    %1240 = vmatpush1.msra.mxu0 %v1075
    %1241 = vmatprep.subr.mxu0 0.0
    %1242 = vmatpush1.msra.mxu0 %v1076
    %1243 = vmatprep.subr.mxu0 0.0
    %1244 = vmatpush1.msra.mxu0 %v1077
    %1245 = vmatprep.subr.mxu0 0.0
    %1246 = vmatpush1.msra.mxu0 %v1078
    %1247 = vmatprep.subr.mxu0 0.0
    %1248 = vmatpush1.msra.mxu0 %v1079
    %1249 = vmatprep.subr.mxu0 0.0
    %1250 = vmatpush1.msra.mxu0 0.0
    %1251 = vmatprep.subr.mxu0 0.0
    %1252 = vmatpush1.msra.mxu0 0.0
    %1253 = vmatprep.subr.mxu0 0.0
    %1254 = vmatpush1.msra.mxu0 0.0
    %1255 = vmatprep.subr.mxu0 0.0
    %1256 = vmatpush1.msra.mxu0 0.0
    %1257 = vmatprep.subr.mxu0 0.0
    %1258 = vmatpush1.msra.mxu0 0.0
    %1259 = vmatprep.subr.mxu0 0.0
    %1260 = vmatpush1.msra.mxu0 0.0
    %1261 = vmatprep.subr.mxu0 0.0
    %1262 = vmatpush1.msra.mxu0 0.0
    %1263 = vmatprep.subr.mxu0 0.0
    %1264 = vmatpush1.msra.mxu0 0.0
    %1265 = vmatprep.subr.mxu0 0.0
    %1266 = vmatpush1.msra.mxu0 0.0
    %1267 = vmatprep.subr.mxu0 0.0
    %1268 = vmatpush1.msra.mxu0 0.0
    %1269 = vmatprep.subr.mxu0 0.0
    %1270 = vmatpush1.msra.mxu0 0.0
    %1271 = vmatprep.subr.mxu0 0.0
    %1272 = vmatpush1.msra.mxu0 0.0
    %1273 = vmatprep.subr.mxu0 0.0
    %1274 = vmatpush1.msra.mxu0 0.0
    %1275 = vmatprep.subr.mxu0 0.0
    %1276 = vmatpush1.msra.mxu0 0.0
    %1277 = vmatprep.subr.mxu0 0.0
    %1278 = vmatpush1.msra.mxu0 0.0
    %1279 = vmatprep.subr.mxu0 0.0
    %1280 = vmatpush1.msra.mxu0 0.0
    %1281 = vmatprep.subr.mxu0 0.0
    %1282 = vmatpush1.msra.mxu0 0.0
    %1283 = vmatprep.subr.mxu0 0.0
    %1284 = vmatpush1.msra.mxu0 0.0
    %1285 = vmatprep.subr.mxu0 0.0
    %1286 = vmatpush1.msra.mxu0 0.0
    %1287 = vmatprep.subr.mxu0 0.0
    %1288 = vmatpush1.msra.mxu0 0.0
    %1289 = vmatprep.subr.mxu0 0.0
    %1290 = vmatpush1.msra.mxu0 0.0
    %1291 = vmatprep.subr.mxu0 0.0
    %1292 = vmatpush1.msra.mxu0 0.0
    %1293 = vmatprep.subr.mxu0 0.0
    %1294 = vmatpush1.msra.mxu0 0.0
    %1295 = vmatprep.subr.mxu0 0.0
    %1296 = vmatpush1.msra.mxu0 0.0
    %1297 = vmatprep.mubr.f32.mxu0 0.0
    %1298 = vmatmul.mubr.f32.gmra.mrb[0].mxu0 %v1228
    %v1299 = vpop.f32.mrb[0].mxu0
    %v1300 = vadd.f32 0.0, %v1299
    %v1301 = vpop.f32.mrb[0].mxu0
    %1302 = vmatprep.mubr.f32.mxu0 0.0
    %1303 = vmatmul.mubr.f32.gmra.mrb[0].mxu0 %v1231
    %v1304 = vpop.f32.mrb[0].mxu0
    %v1305 = vadd.f32 0.0, %v1304
    %v1306 = vpop.f32.mrb[0].mxu0
    %1307 = vdwg.mxu0
    %1308 = vmatprep.subr.mxu0 0.0
    %1309 = vmatpush1.msra.mxu0 %v222
    %1310 = vmatprep.subr.mxu0 0.0
    %1311 = vmatpush1.msra.mxu0 %v223
    %1312 = vmatprep.subr.mxu0 0.0
    %1313 = vmatpush1.msra.mxu0 %v224
    %1314 = vmatprep.subr.mxu0 0.0
    %1315 = vmatpush1.msra.mxu0 %v225
    %1316 = vmatprep.subr.mxu0 0.0
    %1317 = vmatpush1.msra.mxu0 %v226
    %1318 = vmatprep.subr.mxu0 0.0
    %1319 = vmatpush1.msra.mxu0 %v227
    %1320 = vmatprep.subr.mxu0 0.0
    %1321 = vmatpush1.msra.mxu0 %v228
    %1322 = vmatprep.subr.mxu0 0.0
    %1323 = vmatpush1.msra.mxu0 %v229
    %1324 = vmatprep.subr.mxu0 0.0
    %1325 = vmatpush1.msra.mxu0 0.0
    %1326 = vmatprep.subr.mxu0 0.0
    %1327 = vmatpush1.msra.mxu0 0.0
    %1328 = vmatprep.subr.mxu0 0.0
    %1329 = vmatpush1.msra.mxu0 0.0
    %1330 = vmatprep.subr.mxu0 0.0
    %1331 = vmatpush1.msra.mxu0 0.0
    %1332 = vmatprep.subr.mxu0 0.0
    %1333 = vmatpush1.msra.mxu0 0.0
    %1334 = vmatprep.subr.mxu0 0.0
    %1335 = vmatpush1.msra.mxu0 0.0
    %1336 = vmatprep.subr.mxu0 0.0
    %1337 = vmatpush1.msra.mxu0 0.0
    %1338 = vmatprep.subr.mxu0 0.0
    %1339 = vmatpush1.msra.mxu0 0.0
    %1340 = vmatprep.subr.mxu0 0.0
    %1341 = vmatpush1.msra.mxu0 0.0
    %1342 = vmatprep.subr.mxu0 0.0
    %1343 = vmatpush1.msra.mxu0 0.0
    %1344 = vmatprep.subr.mxu0 0.0
    %1345 = vmatpush1.msra.mxu0 0.0
    %1346 = vmatprep.subr.mxu0 0.0
    %1347 = vmatpush1.msra.mxu0 0.0
    %1348 = vmatprep.subr.mxu0 0.0
    %1349 = vmatpush1.msra.mxu0 0.0
    %1350 = vmatprep.subr.mxu0 0.0
    %1351 = vmatpush1.msra.mxu0 0.0
    %1352 = vmatprep.subr.mxu0 0.0
    %1353 = vmatpush1.msra.mxu0 0.0
    %1354 = vmatprep.subr.mxu0 0.0
    %1355 = vmatpush1.msra.mxu0 0.0
    %1356 = vmatprep.subr.mxu0 0.0
    %1357 = vmatpush1.msra.mxu0 0.0
    %1358 = vmatprep.subr.mxu0 0.0
    %1359 = vmatpush1.msra.mxu0 0.0
    %1360 = vmatprep.subr.mxu0 0.0
    %1361 = vmatpush1.msra.mxu0 0.0
    %1362 = vmatprep.subr.mxu0 0.0
    %1363 = vmatpush1.msra.mxu0 0.0
    %1364 = vmatprep.subr.mxu0 0.0
    %1365 = vmatpush1.msra.mxu0 0.0
    %1366 = vmatprep.subr.mxu0 0.0
    %1367 = vmatpush1.msra.mxu0 0.0
    %1368 = vmatprep.subr.mxu0 0.0
    %1369 = vmatpush1.msra.mxu0 0.0
    %1370 = vmatprep.subr.mxu0 0.0
    %1371 = vmatpush1.msra.mxu0 0.0
    %1372 = vmatprep.mubr.f32.mxu0 0.0
    %1373 = vmatmul.mubr.f32.gmra.mrb[0].mxu0 %v1228
    %v1374 = vpop.f32.mrb[0].mxu0
    %v1375 = vadd.f32 0.0, %v1374
    %v1376 = vpop.f32.mrb[0].mxu0
    %1377 = vmatprep.mubr.f32.mxu0 0.0
    %1378 = vmatmul.mubr.f32.gmra.mrb[0].mxu0 %v1231
    %v1379 = vpop.f32.mrb[0].mxu0
    %v1380 = vadd.f32 0.0, %v1379
    %v1381 = vpop.f32.mrb[0].mxu0
    %1382 = vdwg.mxu0
    %v1383 = vrcp.pop %v1375
    %v1384 = vrcp.pop %v1380
    %v1385 = vmul.f32 %v1300, %v1383
    %v1386 = vmul.f32 %v1305, %v1384
    %v1387 = vlaneseq
    %v1388 = vshrl.u32 %v1387, 7
    %v1389 = vsub.s32 3, %v1388
    %v1390 = vrot.slane %v65, %v1389
    %v1392 = vsel %vm77, %v1385, 0
    %v1395 = vsel %vm77, %v1386, 0
    %1397 = vmatprep.subr.mxu0 0.0
    %1398 = vmatpush1.msra.mxu0 %v1060
    %1399 = vmatprep.subr.mxu0 0.0
    %1400 = vmatpush1.msra.mxu0 %v1061
    %1401 = vmatprep.subr.mxu0 0.0
    %1402 = vmatpush1.msra.mxu0 %v1062
    %1403 = vmatprep.subr.mxu0 0.0
    %1404 = vmatpush1.msra.mxu0 %v1063
    %1405 = vmatprep.subr.mxu0 0.0
    %1406 = vmatpush1.msra.mxu0 0.0
    %1407 = vmatprep.subr.mxu0 0.0
    %1408 = vmatpush1.msra.mxu0 0.0
    %1409 = vmatprep.subr.mxu0 0.0
    %1410 = vmatpush1.msra.mxu0 0.0
    %1411 = vmatprep.subr.mxu0 0.0
    %1412 = vmatpush1.msra.mxu0 0.0
    %1413 = vmatprep.subr.mxu0 0.0
    %1414 = vmatpush1.msra.mxu0 0.0
    %1415 = vmatprep.subr.mxu0 0.0
    %1416 = vmatpush1.msra.mxu0 0.0
    %1417 = vmatprep.subr.mxu0 0.0
    %1418 = vmatpush1.msra.mxu0 0.0
    %1419 = vmatprep.subr.mxu0 0.0
    %1420 = vmatpush1.msra.mxu0 0.0
    %1421 = vmatprep.subr.mxu0 0.0
    %1422 = vmatpush1.msra.mxu0 0.0
    %1423 = vmatprep.subr.mxu0 0.0
    %1424 = vmatpush1.msra.mxu0 0.0
    %1425 = vmatprep.subr.mxu0 0.0
    %1426 = vmatpush1.msra.mxu0 0.0
    %1427 = vmatprep.subr.mxu0 0.0
    %1428 = vmatpush1.msra.mxu0 0.0
    %1429 = vmatprep.subr.mxu0 0.0
    %1430 = vmatpush1.msra.mxu0 0.0
    %1431 = vmatprep.subr.mxu0 0.0
    %1432 = vmatpush1.msra.mxu0 0.0
    %1433 = vmatprep.subr.mxu0 0.0
    %1434 = vmatpush1.msra.mxu0 0.0
    %1435 = vmatprep.subr.mxu0 0.0
    %1436 = vmatpush1.msra.mxu0 0.0
    %1437 = vmatprep.subr.mxu0 0.0
    %1438 = vmatpush1.msra.mxu0 0.0
    %1439 = vmatprep.subr.mxu0 0.0
    %1440 = vmatpush1.msra.mxu0 0.0
    %1441 = vmatprep.subr.mxu0 0.0
    %1442 = vmatpush1.msra.mxu0 0.0
    %1443 = vmatprep.subr.mxu0 0.0
    %1444 = vmatpush1.msra.mxu0 0.0
    %1445 = vmatprep.subr.mxu0 0.0
    %1446 = vmatpush1.msra.mxu0 0.0
    %1447 = vmatprep.subr.mxu0 0.0
    %1448 = vmatpush1.msra.mxu0 0.0
    %1449 = vmatprep.subr.mxu0 0.0
    %1450 = vmatpush1.msra.mxu0 0.0
    %1451 = vmatprep.subr.mxu0 0.0
    %1452 = vmatpush1.msra.mxu0 0.0
    %1453 = vmatprep.subr.mxu0 0.0
    %1454 = vmatpush1.msra.mxu0 0.0
    %1455 = vmatprep.subr.mxu0 0.0
    %1456 = vmatpush1.msra.mxu0 0.0
    %1457 = vmatprep.subr.mxu0 0.0
    %1458 = vmatpush1.msra.mxu0 0.0
    %1459 = vmatprep.subr.mxu0 0.0
    %1460 = vmatpush1.msra.mxu0 0.0
    %1461 = vmatprep.mubr.f32.mxu0 0.0
    %1462 = vmatmul.mubr.f32.gmra.mrb[0].mxu0 %v1392
    %v1463 = vpop.f32.mrb[0].mxu0
    %v1464 = vadd.f32 %v1390, %v1463
    %v1465 = vpop.f32.mrb[0].mxu0
    %1466 = vmatprep.mubr.f32.mxu0 0.0
    %1467 = vmatmul.mubr.f32.gmra.mrb[0].mxu0 %v1395
    %v1468 = vpop.f32.mrb[0].mxu0
    %v1469 = vadd.f32 %v1390, %v1468
    %v1470 = vpop.f32.mrb[0].mxu0
    %1471 = vdwg.mxu0
    %v1472 = vadd.f32 %v1464, %v786
    %v1473 = vadd.f32 %v1469, %v787
    %v1474 = vsel %vm77, %v1472, 0.0
    %1475 = vadd.xlane.f32.xlu0 %v1474
    %v1476 = vpop.xlane.xlu0 %1475
    %v1477 = vsel %vm77, %v1473, 0.0
    %1478 = vadd.xlane.f32.xlu0 %v1477
    %v1479 = vpop.xlane.xlu0 %1478
    %v1480 = vmul.f32 %v1476, %v755
    %v1481 = vmul.f32 %v1479, %v755
    %v1482 = vsub.f32 %v1472, %v1480
    %v1483 = vsub.f32 %v1473, %v1481
    %v1484 = vmul.f32 %v1482, %v1482
    %v1485 = vmul.f32 %v1483, %v1483
    %v1486 = vsel %vm77, %v1484, 0.0
    %1487 = vadd.xlane.f32.xlu0 %v1486
    %v1488 = vpop.xlane.xlu0 %1487
    %v1489 = vsel %vm77, %v1485, 0.0
    %1490 = vadd.xlane.f32.xlu0 %v1489
    %v1491 = vpop.xlane.xlu0 %1490
    %v1492 = vmul.f32 %v1488, %v755
    %v1493 = vmul.f32 %v1491, %v755
    %v1494 = vadd.f32 %v1492, 1e-05
    %v1495 = vadd.f32 %v1493, 1e-05
    %v1496 = vrsqrt.pop %v1494
    %v1497 = vrsqrt.pop %v1495
    %v1498 = vmul.f32 %v1482, %v1496
    %v1499 = vmul.f32 %v1483, %v1497
    %v1500 = vlaneseq
    %v1501 = vshrl.u32 %v1500, 7
    %v1502 = vsub.s32 1, %v1501
    %v1503 = vrot.slane %v63, %v1502
    %v1504 = vmul.f32 %v1498, %v1503
    %v1505 = vmul.f32 %v1499, %v1503
    %v1506 = vlaneseq
    %v1507 = vshrl.u32 %v1506, 7
    %v1508 = vsub.s32 1, %v1507
    %v1509 = vrot.slane %v64, %v1508
    %v1510 = vadd.f32 %v1504, %v1509
    %v1511 = vadd.f32 %v1505, %v1509
    %v1512 = vld [vmem:[%s13] sm:$0xff]
    %v1513 = vld [vmem:[%s13 + $0x8] sm:$0xff]
    %v1514 = vld [vmem:[%s13 + $0x10] sm:$0xff]
    %v1515 = vld [vmem:[%s13 + $0x18] sm:$0xff]
    %v1516 = vld [vmem:[%s14] sm:$0x1]
    %v1518 = vlaneseq
    %v1519 = vshrl.u32 %v1518, 7
    %v1520 = vsub.s32 0, %v1519
    %v1521 = vrot.slane %v1516, %v1520
    %v1524 = vsel %vm77, %v1510, 0
    %v1527 = vsel %vm77, %v1511, 0
    %1529 = vmatprep.subr.mxu0 0.0
    %1530 = vmatpush1.msra.mxu0 %v1512
    %1531 = vmatprep.subr.mxu0 0.0
    %1532 = vmatpush1.msra.mxu0 %v1513
    %1533 = vmatprep.subr.mxu0 0.0
    %1534 = vmatpush1.msra.mxu0 %v1514
    %1535 = vmatprep.subr.mxu0 0.0
    %1536 = vmatpush1.msra.mxu0 %v1515
    %1537 = vmatprep.subr.mxu0 0.0
    %1538 = vmatpush1.msra.mxu0 0.0
    %1539 = vmatprep.subr.mxu0 0.0
    %1540 = vmatpush1.msra.mxu0 0.0
    %1541 = vmatprep.subr.mxu0 0.0
    %1542 = vmatpush1.msra.mxu0 0.0
    %1543 = vmatprep.subr.mxu0 0.0
    %1544 = vmatpush1.msra.mxu0 0.0
    %1545 = vmatprep.subr.mxu0 0.0
    %1546 = vmatpush1.msra.mxu0 0.0
    %1547 = vmatprep.subr.mxu0 0.0
    %1548 = vmatpush1.msra.mxu0 0.0
    %1549 = vmatprep.subr.mxu0 0.0
    %1550 = vmatpush1.msra.mxu0 0.0
    %1551 = vmatprep.subr.mxu0 0.0
    %1552 = vmatpush1.msra.mxu0 0.0
    %1553 = vmatprep.subr.mxu0 0.0
    %1554 = vmatpush1.msra.mxu0 0.0
    %1555 = vmatprep.subr.mxu0 0.0
    %1556 = vmatpush1.msra.mxu0 0.0
    %1557 = vmatprep.subr.mxu0 0.0
    %1558 = vmatpush1.msra.mxu0 0.0
    %1559 = vmatprep.subr.mxu0 0.0
    %1560 = vmatpush1.msra.mxu0 0.0
    %1561 = vmatprep.subr.mxu0 0.0
    %1562 = vmatpush1.msra.mxu0 0.0
    %1563 = vmatprep.subr.mxu0 0.0
    %1564 = vmatpush1.msra.mxu0 0.0
    %1565 = vmatprep.subr.mxu0 0.0
    %1566 = vmatpush1.msra.mxu0 0.0
    %1567 = vmatprep.subr.mxu0 0.0
    %1568 = vmatpush1.msra.mxu0 0.0
    %1569 = vmatprep.subr.mxu0 0.0
    %1570 = vmatpush1.msra.mxu0 0.0
    %1571 = vmatprep.subr.mxu0 0.0
    %1572 = vmatpush1.msra.mxu0 0.0
    %1573 = vmatprep.subr.mxu0 0.0
    %1574 = vmatpush1.msra.mxu0 0.0
    %1575 = vmatprep.subr.mxu0 0.0
    %1576 = vmatpush1.msra.mxu0 0.0
    %1577 = vmatprep.subr.mxu0 0.0
    %1578 = vmatpush1.msra.mxu0 0.0
    %1579 = vmatprep.subr.mxu0 0.0
    %1580 = vmatpush1.msra.mxu0 0.0
    %1581 = vmatprep.subr.mxu0 0.0
    %1582 = vmatpush1.msra.mxu0 0.0
    %1583 = vmatprep.subr.mxu0 0.0
    %1584 = vmatpush1.msra.mxu0 0.0
    %1585 = vmatprep.subr.mxu0 0.0
    %1586 = vmatpush1.msra.mxu0 0.0
    %1587 = vmatprep.subr.mxu0 0.0
    %1588 = vmatpush1.msra.mxu0 0.0
    %1589 = vmatprep.subr.mxu0 0.0
    %1590 = vmatpush1.msra.mxu0 0.0
    %1591 = vmatprep.subr.mxu0 0.0
    %1592 = vmatpush1.msra.mxu0 0.0
    %1593 = vmatprep.mubr.f32.mxu0 0.0
    %1594 = vmatmul.mubr.f32.gmra.mrb[0].mxu0 %v1524
    %v1595 = vpop.f32.mrb[0].mxu0
    %v1596 = vadd.f32 %v1521, %v1595
    %v1597 = vpop.f32.mrb[0].mxu0
    %1598 = vmatprep.mubr.f32.mxu0 0.0
    %1599 = vmatmul.mubr.f32.gmra.mrb[0].mxu0 %v1527
    %v1600 = vpop.f32.mrb[0].mxu0
    %v1601 = vadd.f32 %v1521, %v1600
    %v1602 = vpop.f32.mrb[0].mxu0
    %1603 = vdwg.mxu0
    %v1604 = vmax.f32 %v1596, 0.0
    %v1605 = vmax.f32 %v1601, 0.0
    %v1606 = vld [vmem:[%s15] sm:$0xff]
    %v1607 = vld [vmem:[%s15 + $0x8] sm:$0xff]
    %v1608 = vld [vmem:[%s15 + $0x10] sm:$0xff]
    %v1609 = vld [vmem:[%s15 + $0x18] sm:$0xff]
    %v1610 = vld [vmem:[%s15 + $0x20] sm:$0xff]
    %v1611 = vld [vmem:[%s15 + $0x28] sm:$0xff]
    %v1612 = vld [vmem:[%s15 + $0x30] sm:$0xff]
    %v1613 = vld [vmem:[%s15 + $0x38] sm:$0xff]
    %v1614 = vld [vmem:[%s15 + $0x40] sm:$0xff]
    %v1615 = vld [vmem:[%s15 + $0x48] sm:$0xff]
    %v1616 = vld [vmem:[%s15 + $0x50] sm:$0xff]
    %v1617 = vld [vmem:[%s15 + $0x58] sm:$0xff]
    %v1618 = vld [vmem:[%s15 + $0x60] sm:$0xff]
    %v1619 = vld [vmem:[%s15 + $0x68] sm:$0xff]
    %v1620 = vld [vmem:[%s15 + $0x70] sm:$0xff]
    %v1621 = vld [vmem:[%s15 + $0x78] sm:$0xff]
    %v1622 = vld [vmem:[%s16] sm:$0x1]
    %v1624 = vlaneseq
    %v1625 = vshrl.u32 %v1624, 7
    %v1626 = vsub.s32 0, %v1625
    %v1627 = vrot.slane %v1622, %v1626
    %1629 = vmatprep.subr.mxu0 0.0
    %1630 = vmatpush1.msra.mxu0 %v1606
    %1631 = vmatprep.subr.mxu0 0.0
    %1632 = vmatpush1.msra.mxu0 %v1607
    %1633 = vmatprep.subr.mxu0 0.0
    %1634 = vmatpush1.msra.mxu0 %v1608
    %1635 = vmatprep.subr.mxu0 0.0
    %1636 = vmatpush1.msra.mxu0 %v1609
    %1637 = vmatprep.subr.mxu0 0.0
    %1638 = vmatpush1.msra.mxu0 %v1610
    %1639 = vmatprep.subr.mxu0 0.0
    %1640 = vmatpush1.msra.mxu0 %v1611
    %1641 = vmatprep.subr.mxu0 0.0
    %1642 = vmatpush1.msra.mxu0 %v1612
    %1643 = vmatprep.subr.mxu0 0.0
    %1644 = vmatpush1.msra.mxu0 %v1613
    %1645 = vmatprep.subr.mxu0 0.0
    %1646 = vmatpush1.msra.mxu0 %v1614
    %1647 = vmatprep.subr.mxu0 0.0
    %1648 = vmatpush1.msra.mxu0 %v1615
    %1649 = vmatprep.subr.mxu0 0.0
    %1650 = vmatpush1.msra.mxu0 %v1616
    %1651 = vmatprep.subr.mxu0 0.0
    %1652 = vmatpush1.msra.mxu0 %v1617
    %1653 = vmatprep.subr.mxu0 0.0
    %1654 = vmatpush1.msra.mxu0 %v1618
    %1655 = vmatprep.subr.mxu0 0.0
    %1656 = vmatpush1.msra.mxu0 %v1619
    %1657 = vmatprep.subr.mxu0 0.0
    %1658 = vmatpush1.msra.mxu0 %v1620
    %1659 = vmatprep.subr.mxu0 0.0
    %1660 = vmatpush1.msra.mxu0 %v1621
    %1661 = vmatprep.subr.mxu0 0.0
    %1662 = vmatpush1.msra.mxu0 0.0
    %1663 = vmatprep.subr.mxu0 0.0
    %1664 = vmatpush1.msra.mxu0 0.0
    %1665 = vmatprep.subr.mxu0 0.0
    %1666 = vmatpush1.msra.mxu0 0.0
    %1667 = vmatprep.subr.mxu0 0.0
    %1668 = vmatpush1.msra.mxu0 0.0
    %1669 = vmatprep.subr.mxu0 0.0
    %1670 = vmatpush1.msra.mxu0 0.0
    %1671 = vmatprep.subr.mxu0 0.0
    %1672 = vmatpush1.msra.mxu0 0.0
    %1673 = vmatprep.subr.mxu0 0.0
    %1674 = vmatpush1.msra.mxu0 0.0
    %1675 = vmatprep.subr.mxu0 0.0
    %1676 = vmatpush1.msra.mxu0 0.0
    %1677 = vmatprep.subr.mxu0 0.0
    %1678 = vmatpush1.msra.mxu0 0.0
    %1679 = vmatprep.subr.mxu0 0.0
    %1680 = vmatpush1.msra.mxu0 0.0
    %1681 = vmatprep.subr.mxu0 0.0
    %1682 = vmatpush1.msra.mxu0 0.0
    %1683 = vmatprep.subr.mxu0 0.0
    %1684 = vmatpush1.msra.mxu0 0.0
    %1685 = vmatprep.subr.mxu0 0.0
    %1686 = vmatpush1.msra.mxu0 0.0
    %1687 = vmatprep.subr.mxu0 0.0
    %1688 = vmatpush1.msra.mxu0 0.0
    %1689 = vmatprep.subr.mxu0 0.0
    %1690 = vmatpush1.msra.mxu0 0.0
    %1691 = vmatprep.subr.mxu0 0.0
    %1692 = vmatpush1.msra.mxu0 0.0
    %1693 = vmatprep.mubr.f32.mxu0 0.0
    %1694 = vmatmul.mubr.f32.gmra.mrb[0].mxu0 %v1604
    %v1695 = vpop.f32.mrb[0].mxu0
    %v1696 = vadd.f32 %v1627, %v1695
    %v1697 = vpop.f32.mrb[0].mxu0
    %1698 = vmatprep.mubr.f32.mxu0 0.0
    %1699 = vmatmul.mubr.f32.gmra.mrb[0].mxu0 %v1605
    %v1700 = vpop.f32.mrb[0].mxu0
    %v1701 = vadd.f32 %v1627, %v1700
    %v1702 = vpop.f32.mrb[0].mxu0
    %1703 = vdwg.mxu0
    %v1704 = vadd.f32 %v1696, %v1510
    %v1705 = vadd.f32 %v1701, %v1511
    %v1706 = vsel %vm77, %v1704, 0.0
    %1707 = vadd.xlane.f32.xlu0 %v1706
    %v1708 = vpop.xlane.xlu0 %1707
    %v1709 = vsel %vm77, %v1705, 0.0
    %1710 = vadd.xlane.f32.xlu0 %v1709
    %v1711 = vpop.xlane.xlu0 %1710
    %v1712 = vmul.f32 %v1708, %v755
    %v1713 = vmul.f32 %v1711, %v755
    %v1714 = vsub.f32 %v1704, %v1712
    %v1715 = vsub.f32 %v1705, %v1713
    %v1716 = vmul.f32 %v1714, %v1714
    %v1717 = vmul.f32 %v1715, %v1715
    %v1718 = vsel %vm77, %v1716, 0.0
    %1719 = vadd.xlane.f32.xlu0 %v1718
    %v1720 = vpop.xlane.xlu0 %1719
    %v1721 = vsel %vm77, %v1717, 0.0
    %1722 = vadd.xlane.f32.xlu0 %v1721
    %v1723 = vpop.xlane.xlu0 %1722
    %v1724 = vmul.f32 %v1720, %v755
    %v1725 = vmul.f32 %v1723, %v755
    %v1726 = vadd.f32 %v1724, 1e-05
    %v1727 = vadd.f32 %v1725, 1e-05
    %v1728 = vrsqrt.pop %v1726
    %v1729 = vrsqrt.pop %v1727
    %v1730 = vmul.f32 %v1714, %v1728
    %v1731 = vmul.f32 %v1715, %v1729
    %v1732 = vlaneseq
    %v1733 = vshrl.u32 %v1732, 7
    %v1734 = vsub.s32 2, %v1733
    %v1735 = vrot.slane %v63, %v1734
    %v1736 = vmul.f32 %v1730, %v1735
    %v1737 = vmul.f32 %v1731, %v1735
    %v1738 = vlaneseq
    %v1739 = vshrl.u32 %v1738, 7
    %v1740 = vsub.s32 2, %v1739
    %v1741 = vrot.slane %v64, %v1740
    %v1742 = vadd.f32 %v1736, %v1741
    %v1743 = vadd.f32 %v1737, %v1741
    %1744 = vst.msk [vmem:[#allocation2] sm:$0xff] %vm77, %v1742
    %1745 = vst.msk [vmem:[#allocation2 + $0x8] sm:$0xff] %vm77, %v1743
    // Predicated region
    $region70: #{decoder_block.1} parent=1 // pred_check
      _
    $region71: #{decoder_block.1} parent=1 // pred_check_branch
      %1747 = sbr.rel (0) target = $region73
    $region72: #{decoder_block.1} parent=1 // pred_region
      %s1749 = ssub.s32 256, 256
      %1750 = vsyncadd [#allocation3], %s1749
      %s1751 = sshll.u32 [#allocation2], 4
      %s1752 = int_to_ptr.vmem [resolvable:$true] %s1751
      %1757 = dma.vmem_to_hbm [thread:$0]  %s1752, 256, %s17, [#allocation3], 128, 128, 8
    $region73: #{decoder_block.1} parent=1 // pred_fallthru
      _
    // Predicated region
    $region74: #{decoder_block.1} parent=1 // pred_check
      _
    $region75: #{decoder_block.1} parent=1 // pred_check_branch
      %1759 = sbr.rel (0) target = $region77
    $region76: #{decoder_block.1} parent=1 // pred_region
      %1760 = dma.done [#allocation3], 256
    $region77: #{decoder_block.1} parent=1 // pred_fallthru
      _
    %1761 = vsyncpa [#allocation3], 1

</llo_original>
